<compile_context>
chip_gen: v6e
topology: v6e:2x2x1
jax: 0.10.0
libtpu: 0.0.40
codegen_flags: <defaults>
</compile_context>

<pallas_src>
import math
import functools

import jax
import jax.numpy as jnp
from jax.experimental import pallas as pl
from jax.experimental.pallas import tpu as pltpu


# ---------------------------------------------------------------------------
# Pallas kernel: full encoder stack, one (batch-tile, layer) grid step per call
# ---------------------------------------------------------------------------
def _encoder_stack_kernel(mb_ref, x_ref,
                          wq_ref, bq_ref, wk_ref, bk_ref, wv_ref, bv_ref,
                          wo_ref, bo_ref,
                          g1_ref, be1_ref,
                          w1_ref, b1_ref, w2_ref, b2_ref,
                          g2_ref, be2_ref,
                          o_ref,
                          *, num_heads, head_dim, f_chunk, n_f_chunks, eps=1e-5):
    layer = pl.program_id(1)

    # Layer 0: seed the VMEM-resident activation carry (o_ref persists across
    # the layer axis because its block index does not depend on the layer id).
    @pl.when(layer == 0)
    def _():
        o_ref[...] = x_ref[...]

    Bt, S, D = o_ref.shape
    M = Bt * S

    x = o_ref[...]                           # (Bt, S, D) f32 current activations
    x2d = x.reshape(M, D)
    x2d_bf = x2d.astype(jnp.bfloat16)

    # Additive key-padding mask built in-kernel from the (Bt, 1, S) pad flags.
    pad = mb_ref[...]                        # (Bt, 1, S), 1.0 where token == -1
    bias = jnp.where(pad > 0.5, -1e9, 0.0).astype(jnp.float32)

    # --- QKV projections: bf16 MXU inputs, f32 accumulation, M = Bt*S rows ---
    q = jnp.dot(x2d_bf, wq_ref[0], preferred_element_type=jnp.float32) + bq_ref[0]
    k = jnp.dot(x2d_bf, wk_ref[0], preferred_element_type=jnp.float32) + bk_ref[0]
    v = jnp.dot(x2d_bf, wv_ref[0], preferred_element_type=jnp.float32) + bv_ref[0]

    scale = 1.0 / math.sqrt(head_dim)
    q3 = (q * scale).reshape(Bt, S, D).astype(jnp.bfloat16)
    k3 = k.reshape(Bt, S, D).astype(jnp.bfloat16)
    v3 = v.reshape(Bt, S, D).astype(jnp.bfloat16)

    # --- multi-head attention: heads statically unrolled; each head's context
    #     is folded directly into the output projection (no VMEM scratch, no
    #     lane-offset masked stores, no full (Bt,S,D) re-read) ---
    proj = jnp.zeros((M, D), jnp.float32)
    for h in range(num_heads):
        sl = slice(h * head_dim, (h + 1) * head_dim)
        qh, kh, vh = q3[:, :, sl], k3[:, :, sl], v3[:, :, sl]      # (Bt,S,Dh) bf16
        s = jnp.einsum('bqd,bkd->bqk', qh, kh,
                       preferred_element_type=jnp.float32) + bias
        s = s - jnp.max(s, axis=-1, keepdims=True)
        p = jnp.exp(s)
        p = p * pl.reciprocal(jnp.sum(p, axis=-1, keepdims=True), approx=True)
        ctx = jnp.einsum('bqk,bkd->bqd', p.astype(jnp.bfloat16), vh,
                         preferred_element_type=jnp.float32)       # (Bt,S,Dh) f32
        proj = proj + jnp.dot(ctx.reshape(M, head_dim).astype(jnp.bfloat16),
                              wo_ref[0, sl, :],
                              preferred_element_type=jnp.float32)

    # --- residual + LayerNorm 1 (post-LN) ---
    h1 = x2d + proj + bo_ref[0]
    mu = jnp.mean(h1, axis=-1, keepdims=True)
    var = jnp.mean((h1 - mu) ** 2, axis=-1, keepdims=True)
    h1 = (h1 - mu) * jax.lax.rsqrt(var + eps) * g1_ref[0] + be1_ref[0]

    # --- feed-forward (ReLU), blocked along the hidden (F) axis so the (M, F)
    #     f32 intermediate never materializes whole ---
    h1_bf = h1.astype(jnp.bfloat16)
    ff = jnp.zeros((M, D), jnp.float32)
    for c in range(n_f_chunks):
        c0 = c * f_chunk
        f = jnp.dot(h1_bf, w1_ref[0, :, c0:c0 + f_chunk],
                    preferred_element_type=jnp.float32) + b1_ref[0, :, c0:c0 + f_chunk]
        f = jnp.maximum(f, 0.0).astype(jnp.bfloat16)
        ff = ff + jnp.dot(f, w2_ref[0, c0:c0 + f_chunk, :],
                          preferred_element_type=jnp.float32)

    # --- residual + LayerNorm 2 ---
    h2 = h1 + ff + b2_ref[0]
    mu2 = jnp.mean(h2, axis=-1, keepdims=True)
    var2 = jnp.mean((h2 - mu2) ** 2, axis=-1, keepdims=True)
    out = (h2 - mu2) * jax.lax.rsqrt(var2 + eps) * g2_ref[0] + be2_ref[0]

    o_ref[...] = out.reshape(Bt, S, D)


# ---------------------------------------------------------------------------
# Host-side sizing helpers (generation-aware)
# ---------------------------------------------------------------------------
def _vmem_capacity_bytes():
    try:
        return int(pltpu.get_tpu_info().vmem_capacity_bytes)
    except Exception:
        return 64 * 1024 * 1024          # conservative (v7x per-TC VMEM)


def _vmem_need_bytes(bt, S, D, F, f_chunk):
    """Rough per-grid-step working set (double-buffered IO + temporaries)."""
    M = bt * S
    w_bf16 = 2 * (4 * D * D + 2 * D * F)          # per-layer matmul weights (bf16)
    small_f32 = 4 * (9 * D + F)                   # biases + LayerNorm params
    in_f32 = 4 * (bt * S * D + bt * S)            # embedding block + pad flags
    out_f32 = 4 * (bt * S * D)                    # resident activation carry
    act = 4 * (8 * M * D + 2 * bt * S * S + M * f_chunk)   # compiler temporaries
    return 2 * (w_bf16 + small_f32 + in_f32) + 2 * out_f32 + act


# ---------------------------------------------------------------------------
# Wrapper: one pallas_call over (batch_tiles, num_layers)
# ---------------------------------------------------------------------------
def encoder_stack(x, pad_mask, params, *, num_heads, batch_tile=None):
    """x: (B, S, D) f32 embeddings; pad_mask: (B, 1, S) f32 (1.0 at pad positions).
    params: dict of per-layer weights stacked along a leading layer axis L."""
    B, S, D = x.shape
    L = params["wq"].shape[0]
    F = params["w1"].shape[2]
    assert D % num_heads == 0
    head_dim = D // num_heads

    # FFN hidden-axis chunking (single chunk when F is small).
    f_chunk = F
    if F > 1024:
        for c in (1024, 512, 256):
            if F % c == 0:
                f_chunk = c
                break
    n_f_chunks = F // f_chunk

    # VMEM budget: never request more than physical VMEM minus headroom (v7x = 64 MiB).
    cap = _vmem_capacity_bytes()
    budget = max(cap - 16 * 1024 * 1024, cap // 2)

    if batch_tile is None:
        batch_tile = 1
        for bt in sorted((d for d in range(1, B + 1) if B % d == 0), reverse=True):
            if B >= 2 and B // bt < 2:
                continue   # keep >= 2 grid steps on the parallel axis (v7x: 2 TCs)
            if _vmem_need_bytes(bt, S, D, F, f_chunk) <= budget:
                batch_tile = bt
                break
    Bt = batch_tile
    assert B % Bt == 0

    need = _vmem_need_bytes(Bt, S, D, F, f_chunk)
    vmem_limit = int(min(budget, max(32 * 1024 * 1024, int(1.25 * need))))

    kernel = functools.partial(_encoder_stack_kernel,
                               num_heads=num_heads, head_dim=head_dim,
                               f_chunk=f_chunk, n_f_chunks=n_f_chunks)

    # Matmul weights live in HBM as bf16 (half the DMA / VMEM); biases & LN stay f32.
    bf16 = jnp.bfloat16
    wq, wk, wv, wo = (params[k].astype(bf16) for k in ("wq", "wk", "wv", "wo"))
    w1, w2 = params["w1"].astype(bf16), params["w2"].astype(bf16)

    def wspec(shape):
        # One layer's block, selected by the layer grid axis, constant over batch.
        return pl.BlockSpec((1,) + shape, lambda b, l: (l,) + (0,) * len(shape))

    in_specs = [
        pl.BlockSpec((Bt, 1, S), lambda b, l: (b, 0, 0)),   # pad flags
        pl.BlockSpec((Bt, S, D), lambda b, l: (b, 0, 0)),   # embeddings (read at layer 0)
        wspec((D, D)), wspec((1, D)),                       # wq, bq
        wspec((D, D)), wspec((1, D)),                       # wk, bk
        wspec((D, D)), wspec((1, D)),                       # wv, bv
        wspec((D, D)), wspec((1, D)),                       # wo, bo
        wspec((1, D)), wspec((1, D)),                       # ln1 gamma, beta
        wspec((D, F)), wspec((1, F)),                       # w1, b1
        wspec((F, D)), wspec((1, D)),                       # w2, b2
        wspec((1, D)), wspec((1, D)),                       # ln2 gamma, beta
    ]

    # Advisory cost estimate so XLA schedules surrounding ops around this call.
    Mtot = B * S
    flops = 2 * L * (4 * Mtot * D * D + 2 * Mtot * D * F + 2 * B * S * S * D)
    transcendentals = L * (B * S * S + 2 * B * S)
    bytes_accessed = (2 * 4 * B * S * D + 4 * B * S
                      + 2 * L * (4 * D * D + 2 * D * F)
                      + 4 * L * (9 * D + F))
    cost = pl.CostEstimate(flops=int(flops),
                           transcendentals=int(transcendentals),
                           bytes_accessed=int(bytes_accessed))

    return pl.pallas_call(
        kernel,
        out_shape=jax.ShapeDtypeStruct((B, S, D), jnp.float32),
        grid=(B // Bt, L),
        in_specs=in_specs,
        out_specs=pl.BlockSpec((Bt, S, D), lambda b, l: (b, 0, 0)),
        compiler_params=pltpu.CompilerParams(
            dimension_semantics=("parallel", "arbitrary"),
            vmem_limit_bytes=vmem_limit),
        cost_estimate=cost,
    )(pad_mask, x,
      wq, params["bq"], wk, params["bk"], wv, params["bv"], wo, params["bo"],
      params["ln1_g"], params["ln1_b"],
      w1, params["b1"], w2, params["b2"],
      params["ln2_g"], params["ln2_b"])


# ---------------------------------------------------------------------------
# Glue: embedding + sinusoidal positional encoding (plain JAX)
# ---------------------------------------------------------------------------
def sinusoidal_pe(seq_len, dim):
    pos = jnp.arange(seq_len, dtype=jnp.float32)[:, None]
    i = jnp.arange(0, dim, 2, dtype=jnp.float32)
    angle = pos / jnp.power(10000.0, i / dim)
    pe = jnp.zeros((seq_len, dim), jnp.float32)
    pe = pe.at[:, 0::2].set(jnp.sin(angle))
    pe = pe.at[:, 1::2].set(jnp.cos(angle))
    return pe


def embed(tokens, emb_table):
    # tokens: (B, S) int32, -1 means padding -> zero embedding
    D = emb_table.shape[1]
    safe = jnp.where(tokens == -1, 0, tokens)
    e = emb_table[safe] * (tokens != -1)[..., None].astype(jnp.float32)
    e = e * math.sqrt(D) + sinusoidal_pe(tokens.shape[1], D)[None]
    return e.astype(jnp.float32)


# ---------------------------------------------------------------------------
# Parameter init + full forward
# ---------------------------------------------------------------------------
def init_params(key, num_embed, dim_model, dim_feedforward, num_layers):
    D, F, L = dim_model, dim_feedforward, num_layers
    ks = jax.random.split(key, 7)
    emb_table = jax.random.normal(ks[0], (num_embed, D), jnp.float32) * 0.02
    params = dict(
        wq=jax.random.normal(ks[1], (L, D, D), jnp.float32) * 0.02,
        bq=jnp.zeros((L, 1, D), jnp.float32),
        wk=jax.random.normal(ks[2], (L, D, D), jnp.float32) * 0.02,
        bk=jnp.zeros((L, 1, D), jnp.float32),
        wv=jax.random.normal(ks[3], (L, D, D), jnp.float32) * 0.02,
        bv=jnp.zeros((L, 1, D), jnp.float32),
        wo=jax.random.normal(ks[4], (L, D, D), jnp.float32) * 0.02,
        bo=jnp.zeros((L, 1, D), jnp.float32),
        ln1_g=jnp.ones((L, 1, D), jnp.float32),
        ln1_b=jnp.zeros((L, 1, D), jnp.float32),
        w1=jax.random.normal(ks[5], (L, D, F), jnp.float32) * 0.02,
        b1=jnp.zeros((L, 1, F), jnp.float32),
        w2=jax.random.normal(ks[6], (L, F, D), jnp.float32) * 0.02,
        b2=jnp.zeros((L, 1, D), jnp.float32),
        ln2_g=jnp.ones((L, 1, D), jnp.float32),
        ln2_b=jnp.zeros((L, 1, D), jnp.float32),
    )
    return emb_table, params


def encoder_forward(tokens, emb_table, params, *, num_heads, batch_tile=None):
    # Reference: mask = (x == -1) broadcast over query positions (key-axis mask).
    pad_mask = (tokens == -1)[:, None, :].astype(jnp.float32)     # (B, 1, S)
    x = embed(tokens, emb_table)                                  # (B, S, D)
    return encoder_stack(x, pad_mask, params,
                         num_heads=num_heads, batch_tile=batch_tile)


# ---------------------------------------------------------------------------
if __name__ == "__main__":
    NUM_EMBED = 64      # vocab size (858 in original; small synthetic)
    DIM_MODEL = 32
    NUM_HEADS = 4
    NUM_LAYERS = 2
    DIM_FF = 4 * DIM_MODEL
    BATCH = 2
    SEQ = 8

    key = jax.random.PRNGKey(0)
    k_tok, k_par = jax.random.split(key)

    tokens = jax.random.randint(k_tok, (BATCH, SEQ), 0, NUM_EMBED, dtype=jnp.int32)
    # mark a couple of padding positions (-1) to exercise the mask path
    tokens = tokens.at[1, -2:].set(-1)

    emb_table, params = init_params(k_par, NUM_EMBED, DIM_MODEL, DIM_FF, NUM_LAYERS)

    out = encoder_forward(tokens, emb_table, params, num_heads=NUM_HEADS)
    out = jax.block_until_ready(out)

    assert out.shape == (BATCH, SEQ, DIM_MODEL)
    assert jnp.all(jnp.isfinite(out))
    print("KERNEL_OK")
</pallas_src>

<mosaic_0001>
module attributes {stable_mosaic.version = 11 : i64} {
  func.func @_encoder_stack_kernel(%arg0: i32, %arg1: i32, %arg2: memref<1x1x8xf32, #tpu.memory_space<vmem>>, %arg3: memref<1x8x32xf32, #tpu.memory_space<vmem>>, %arg4: memref<1x32x32xbf16, #tpu.memory_space<vmem>>, %arg5: memref<1x1x32xf32, #tpu.memory_space<vmem>>, %arg6: memref<1x32x32xbf16, #tpu.memory_space<vmem>>, %arg7: memref<1x1x32xf32, #tpu.memory_space<vmem>>, %arg8: memref<1x32x32xbf16, #tpu.memory_space<vmem>>, %arg9: memref<1x1x32xf32, #tpu.memory_space<vmem>>, %arg10: memref<1x32x32xbf16, #tpu.memory_space<vmem>>, %arg11: memref<1x1x32xf32, #tpu.memory_space<vmem>>, %arg12: memref<1x1x32xf32, #tpu.memory_space<vmem>>, %arg13: memref<1x1x32xf32, #tpu.memory_space<vmem>>, %arg14: memref<1x32x128xbf16, #tpu.memory_space<vmem>>, %arg15: memref<1x1x128xf32, #tpu.memory_space<vmem>>, %arg16: memref<1x128x32xbf16, #tpu.memory_space<vmem>>, %arg17: memref<1x1x32xf32, #tpu.memory_space<vmem>>, %arg18: memref<1x1x32xf32, #tpu.memory_space<vmem>>, %arg19: memref<1x1x32xf32, #tpu.memory_space<vmem>>, %arg20: memref<1x8x32xf32, #tpu.memory_space<vmem>>) attributes {dimension_semantics = [#tpu.dimension_semantics<parallel>, #tpu.dimension_semantics<arbitrary>], iteration_bounds = array<i64: 2, 2>, scalar_prefetch = 0 : i64, scratch_operands = 0 : i64, tpu.core_type = #tpu.core_type<tc>, window_params = [{transform_indices = @transform_0, window_bounds = array<i64: 1, 1, 8>}, {transform_indices = @transform_1, window_bounds = array<i64: 1, 8, 32>}, {transform_indices = @transform_2, window_bounds = array<i64: 1, 32, 32>}, {transform_indices = @transform_3, window_bounds = array<i64: 1, 1, 32>}, {transform_indices = @transform_4, window_bounds = array<i64: 1, 32, 32>}, {transform_indices = @transform_5, window_bounds = array<i64: 1, 1, 32>}, {transform_indices = @transform_6, window_bounds = array<i64: 1, 32, 32>}, {transform_indices = @transform_7, window_bounds = array<i64: 1, 1, 32>}, {transform_indices = @transform_8, window_bounds = array<i64: 1, 32, 32>}, {transform_indices = @transform_9, window_bounds = array<i64: 1, 1, 32>}, {transform_indices = @transform_10, window_bounds = array<i64: 1, 1, 32>}, {transform_indices = @transform_11, window_bounds = array<i64: 1, 1, 32>}, {transform_indices = @transform_12, window_bounds = array<i64: 1, 32, 128>}, {transform_indices = @transform_13, window_bounds = array<i64: 1, 1, 128>}, {transform_indices = @transform_14, window_bounds = array<i64: 1, 128, 32>}, {transform_indices = @transform_15, window_bounds = array<i64: 1, 1, 32>}, {transform_indices = @transform_16, window_bounds = array<i64: 1, 1, 32>}, {transform_indices = @transform_17, window_bounds = array<i64: 1, 1, 32>}, {transform_indices = @transform_18, window_bounds = array<i64: 1, 8, 32>}]} {
    %c0_i32 = arith.constant 0 : i32
    %0 = arith.cmpi eq, %arg1, %c0_i32 : i32
    %1 = arith.extui %0 : i1 to i32
    %c0_i32_0 = arith.constant 0 : i32
    %2 = arith.cmpi ne, %1, %c0_i32_0 : i32
    scf.if %2 {
      %c0_104 = arith.constant 0 : index
      %c0_105 = arith.constant 0 : index
      %c0_106 = arith.constant 0 : index
      %218 = vector.load %arg3[%c0_104, %c0_105, %c0_106] : memref<1x8x32xf32, #tpu.memory_space<vmem>>, vector<1x8x32xf32>
      %c0_107 = arith.constant 0 : index
      %c0_108 = arith.constant 0 : index
      %c0_109 = arith.constant 0 : index
      %219 = vector.load %arg20[%c0_107, %c0_108, %c0_109] : memref<1x8x32xf32, #tpu.memory_space<vmem>>, vector<1x8x32xf32>
      tpu.vector_store %arg20[%c0_107, %c0_108, %c0_109], %218 {strides = array<i32>} : memref<1x8x32xf32, #tpu.memory_space<vmem>>, vector<1x8x32xf32>,
    } else {
    }
    %c0 = arith.constant 0 : index
    %c0_1 = arith.constant 0 : index
    %c0_2 = arith.constant 0 : index
    %3 = vector.load %arg20[%c0, %c0_1, %c0_2] : memref<1x8x32xf32, #tpu.memory_space<vmem>>, vector<1x8x32xf32>
    %4 = vector.shape_cast %3 : vector<1x8x32xf32> to vector<8x32xf32>
    %5 = arith.truncf %4 : vector<8x32xf32> to vector<8x32xbf16>
    %c0_3 = arith.constant 0 : index
    %c0_4 = arith.constant 0 : index
    %c0_5 = arith.constant 0 : index
    %6 = vector.load %arg2[%c0_3, %c0_4, %c0_5] : memref<1x1x8xf32, #tpu.memory_space<vmem>>, vector<1x1x8xf32>
    %cst = arith.constant 5.000000e-01 : f32
    %7 = vector.broadcast %cst : f32 to vector<1x1x8xf32>
    %8 = arith.cmpf ogt, %6, %7 : vector<1x1x8xf32>
    %cst_6 = arith.constant -1.000000e+09 : f32
    %cst_7 = arith.constant 0.000000e+00 : f32
    %9 = vector.broadcast %cst_6 : f32 to vector<1x1x8xf32>
    %10 = vector.broadcast %cst_7 : f32 to vector<1x1x8xf32>
    %11 = arith.select %8, %9, %10 : vector<1x1x8xi1>, vector<1x1x8xf32>
    %c0_8 = arith.constant 0 : index
    %c0_9 = arith.constant 0 : index
    %c0_10 = arith.constant 0 : index
    %12 = vector.load %arg4[%c0_8, %c0_9, %c0_10] : memref<1x32x32xbf16, #tpu.memory_space<vmem>>, vector<1x32x32xbf16>
    %13 = vector.shape_cast %12 : vector<1x32x32xbf16> to vector<32x32xbf16>
    %cst_11 = arith.constant dense<0.000000e+00> : vector<8x32xf32>
    %14 = tpu.matmul %5, %13, %cst_11 {dimension_numbers = #tpu.dot_dimension_numbers<[1], [0], [0], [1], [0, 0, 1, 1], [], []>} : vector<8x32xbf16>, vector<32x32xbf16>, vector<8x32xf32> -> vector<8x32xf32>
    %c0_12 = arith.constant 0 : index
    %c0_13 = arith.constant 0 : index
    %c0_14 = arith.constant 0 : index
    %15 = vector.load %arg5[%c0_12, %c0_13, %c0_14] : memref<1x1x32xf32, #tpu.memory_space<vmem>>, vector<1x1x32xf32>
    %16 = vector.shape_cast %15 : vector<1x1x32xf32> to vector<1x32xf32>
    %17 = vector.broadcast %16 : vector<1x32xf32> to vector<8x32xf32>
    %18 = arith.addf %14, %17 : vector<8x32xf32>
    %c0_15 = arith.constant 0 : index
    %c0_16 = arith.constant 0 : index
    %c0_17 = arith.constant 0 : index
    %19 = vector.load %arg6[%c0_15, %c0_16, %c0_17] : memref<1x32x32xbf16, #tpu.memory_space<vmem>>, vector<1x32x32xbf16>
    %20 = vector.shape_cast %19 : vector<1x32x32xbf16> to vector<32x32xbf16>
    %cst_18 = arith.constant dense<0.000000e+00> : vector<8x32xf32>
    %21 = tpu.matmul %5, %20, %cst_18 {dimension_numbers = #tpu.dot_dimension_numbers<[1], [0], [0], [1], [0, 0, 1, 1], [], []>} : vector<8x32xbf16>, vector<32x32xbf16>, vector<8x32xf32> -> vector<8x32xf32>
    %c0_19 = arith.constant 0 : index
    %c0_20 = arith.constant 0 : index
    %c0_21 = arith.constant 0 : index
    %22 = vector.load %arg7[%c0_19, %c0_20, %c0_21] : memref<1x1x32xf32, #tpu.memory_space<vmem>>, vector<1x1x32xf32>
    %23 = vector.shape_cast %22 : vector<1x1x32xf32> to vector<1x32xf32>
    %24 = vector.broadcast %23 : vector<1x32xf32> to vector<8x32xf32>
    %25 = arith.addf %21, %24 : vector<8x32xf32>
    %c0_22 = arith.constant 0 : index
    %c0_23 = arith.constant 0 : index
    %c0_24 = arith.constant 0 : index
    %26 = vector.load %arg8[%c0_22, %c0_23, %c0_24] : memref<1x32x32xbf16, #tpu.memory_space<vmem>>, vector<1x32x32xbf16>
    %27 = vector.shape_cast %26 : vector<1x32x32xbf16> to vector<32x32xbf16>
    %cst_25 = arith.constant dense<0.000000e+00> : vector<8x32xf32>
    %28 = tpu.matmul %5, %27, %cst_25 {dimension_numbers = #tpu.dot_dimension_numbers<[1], [0], [0], [1], [0, 0, 1, 1], [], []>} : vector<8x32xbf16>, vector<32x32xbf16>, vector<8x32xf32> -> vector<8x32xf32>
    %c0_26 = arith.constant 0 : index
    %c0_27 = arith.constant 0 : index
    %c0_28 = arith.constant 0 : index
    %29 = vector.load %arg9[%c0_26, %c0_27, %c0_28] : memref<1x1x32xf32, #tpu.memory_space<vmem>>, vector<1x1x32xf32>
    %30 = vector.shape_cast %29 : vector<1x1x32xf32> to vector<1x32xf32>
    %31 = vector.broadcast %30 : vector<1x32xf32> to vector<8x32xf32>
    %32 = arith.addf %28, %31 : vector<8x32xf32>
    %cst_29 = arith.constant 0.353553385 : f32
    %33 = vector.broadcast %cst_29 : f32 to vector<8x32xf32>
    %34 = arith.mulf %18, %33 : vector<8x32xf32>
    %35 = vector.shape_cast %34 : vector<8x32xf32> to vector<1x8x32xf32>
    %36 = arith.truncf %35 : vector<1x8x32xf32> to vector<1x8x32xbf16>
    %37 = vector.shape_cast %25 : vector<8x32xf32> to vector<1x8x32xf32>
    %38 = arith.truncf %37 : vector<1x8x32xf32> to vector<1x8x32xbf16>
    %39 = vector.shape_cast %32 : vector<8x32xf32> to vector<1x8x32xf32>
    %40 = arith.truncf %39 : vector<1x8x32xf32> to vector<1x8x32xbf16>
    %cst_30 = arith.constant 0.000000e+00 : f32
    %41 = vector.broadcast %cst_30 : f32 to vector<8x32xf32>
    %42 = vector.extract_strided_slice %36 {offsets = [0, 0, 0], sizes = [1, 8, 8], strides = [1, 1, 1]} : vector<1x8x32xbf16> to vector<1x8x8xbf16>
    %43 = vector.extract_strided_slice %38 {offsets = [0, 0, 0], sizes = [1, 8, 8], strides = [1, 1, 1]} : vector<1x8x32xbf16> to vector<1x8x8xbf16>
    %44 = vector.extract_strided_slice %40 {offsets = [0, 0, 0], sizes = [1, 8, 8], strides = [1, 1, 1]} : vector<1x8x32xbf16> to vector<1x8x8xbf16>
    "tpu.trace_start"() <{level = 10 : i32, message = "bqd,bkd->bqk"}> : () -> ()
    %cst_31 = arith.constant dense<0.000000e+00> : vector<1x8x8xf32>
    %45 = tpu.matmul %42, %43, %cst_31 {dimension_numbers = #tpu.dot_dimension_numbers<[2], [2], [1], [1], [0, 0, 0, 1, 1, 1], [0], [0]>} : vector<1x8x8xbf16>, vector<1x8x8xbf16>, vector<1x8x8xf32> -> vector<1x8x8xf32>
    "tpu.trace_stop"() : () -> ()
    %46 = vector.broadcast %11 : vector<1x1x8xf32> to vector<1x8x8xf32>
    %47 = arith.addf %45, %46 : vector<1x8x8xf32>
    %cst_32 = arith.constant dense<0xFF800000> : vector<1x8xf32>
    %48 = vector.multi_reduction <maximumf>, %47, %cst_32 [2] : vector<1x8x8xf32> to vector<1x8xf32>
    %49 = vector.shape_cast %48 : vector<1x8xf32> to vector<1x8x1xf32>
    %50 = vector.broadcast %49 : vector<1x8x1xf32> to vector<1x8x8xf32>
    %51 = arith.subf %47, %50 : vector<1x8x8xf32>
    %52 = math.exp %51 : vector<1x8x8xf32>
    %cst_33 = arith.constant dense<0.000000e+00> : vector<1x8xf32>
    %53 = vector.multi_reduction <add>, %52, %cst_33 [2] : vector<1x8x8xf32> to vector<1x8xf32>
    %54 = vector.shape_cast %53 : vector<1x8xf32> to vector<1x8x1xf32>
    %55 = tpu.reciprocal %54 {approx = true} : vector<1x8x1xf32> -> vector<1x8x1xf32>
    %56 = vector.broadcast %55 : vector<1x8x1xf32> to vector<1x8x8xf32>
    %57 = arith.mulf %52, %56 : vector<1x8x8xf32>
    %58 = arith.truncf %57 : vector<1x8x8xf32> to vector<1x8x8xbf16>
    "tpu.trace_start"() <{level = 10 : i32, message = "bqk,bkd->bqd"}> : () -> ()
    %cst_34 = arith.constant dense<0.000000e+00> : vector<1x8x8xf32>
    %59 = tpu.matmul %58, %44, %cst_34 {dimension_numbers = #tpu.dot_dimension_numbers<[2], [1], [1], [2], [0, 0, 0, 1, 1, 2], [0], [0]>} : vector<1x8x8xbf16>, vector<1x8x8xbf16>, vector<1x8x8xf32> -> vector<1x8x8xf32>
    "tpu.trace_stop"() : () -> ()
    %60 = vector.shape_cast %59 : vector<1x8x8xf32> to vector<8x8xf32>
    %61 = arith.truncf %60 : vector<8x8xf32> to vector<8x8xbf16>
    %c0_35 = arith.constant 0 : index
    %c0_36 = arith.constant 0 : index
    %c0_37 = arith.constant 0 : index
    %62 = vector.load %arg10[%c0_35, %c0_36, %c0_37] : memref<1x32x32xbf16, #tpu.memory_space<vmem>>, vector<1x8x32xbf16>
    %63 = vector.shape_cast %62 : vector<1x8x32xbf16> to vector<8x32xbf16>
    %cst_38 = arith.constant dense<0.000000e+00> : vector<8x32xf32>
    %64 = tpu.matmul %61, %63, %cst_38 {dimension_numbers = #tpu.dot_dimension_numbers<[1], [0], [0], [1], [0, 0, 1, 1], [], []>} : vector<8x8xbf16>, vector<8x32xbf16>, vector<8x32xf32> -> vector<8x32xf32>
    %65 = arith.addf %41, %64 : vector<8x32xf32>
    %66 = vector.extract_strided_slice %36 {offsets = [0, 0, 8], sizes = [1, 8, 8], strides = [1, 1, 1]} : vector<1x8x32xbf16> to vector<1x8x8xbf16>
    %67 = vector.extract_strided_slice %38 {offsets = [0, 0, 8], sizes = [1, 8, 8], strides = [1, 1, 1]} : vector<1x8x32xbf16> to vector<1x8x8xbf16>
    %68 = vector.extract_strided_slice %40 {offsets = [0, 0, 8], sizes = [1, 8, 8], strides = [1, 1, 1]} : vector<1x8x32xbf16> to vector<1x8x8xbf16>
    "tpu.trace_start"() <{level = 10 : i32, message = "bqd,bkd->bqk"}> : () -> ()
    %cst_39 = arith.constant dense<0.000000e+00> : vector<1x8x8xf32>
    %69 = tpu.matmul %66, %67, %cst_39 {dimension_numbers = #tpu.dot_dimension_numbers<[2], [2], [1], [1], [0, 0, 0, 1, 1, 1], [0], [0]>} : vector<1x8x8xbf16>, vector<1x8x8xbf16>, vector<1x8x8xf32> -> vector<1x8x8xf32>
    "tpu.trace_stop"() : () -> ()
    %70 = vector.broadcast %11 : vector<1x1x8xf32> to vector<1x8x8xf32>
    %71 = arith.addf %69, %70 : vector<1x8x8xf32>
    %cst_40 = arith.constant dense<0xFF800000> : vector<1x8xf32>
    %72 = vector.multi_reduction <maximumf>, %71, %cst_40 [2] : vector<1x8x8xf32> to vector<1x8xf32>
    %73 = vector.shape_cast %72 : vector<1x8xf32> to vector<1x8x1xf32>
    %74 = vector.broadcast %73 : vector<1x8x1xf32> to vector<1x8x8xf32>
    %75 = arith.subf %71, %74 : vector<1x8x8xf32>
    %76 = math.exp %75 : vector<1x8x8xf32>
    %cst_41 = arith.constant dense<0.000000e+00> : vector<1x8xf32>
    %77 = vector.multi_reduction <add>, %76, %cst_41 [2] : vector<1x8x8xf32> to vector<1x8xf32>
    %78 = vector.shape_cast %77 : vector<1x8xf32> to vector<1x8x1xf32>
    %79 = tpu.reciprocal %78 {approx = true} : vector<1x8x1xf32> -> vector<1x8x1xf32>
    %80 = vector.broadcast %79 : vector<1x8x1xf32> to vector<1x8x8xf32>
    %81 = arith.mulf %76, %80 : vector<1x8x8xf32>
    %82 = arith.truncf %81 : vector<1x8x8xf32> to vector<1x8x8xbf16>
    "tpu.trace_start"() <{level = 10 : i32, message = "bqk,bkd->bqd"}> : () -> ()
    %cst_42 = arith.constant dense<0.000000e+00> : vector<1x8x8xf32>
    %83 = tpu.matmul %82, %68, %cst_42 {dimension_numbers = #tpu.dot_dimension_numbers<[2], [1], [1], [2], [0, 0, 0, 1, 1, 2], [0], [0]>} : vector<1x8x8xbf16>, vector<1x8x8xbf16>, vector<1x8x8xf32> -> vector<1x8x8xf32>
    "tpu.trace_stop"() : () -> ()
    %84 = vector.shape_cast %83 : vector<1x8x8xf32> to vector<8x8xf32>
    %85 = arith.truncf %84 : vector<8x8xf32> to vector<8x8xbf16>
    %c0_43 = arith.constant 0 : index
    %c8 = arith.constant 8 : index
    %c0_44 = arith.constant 0 : index
    %86 = vector.load %arg10[%c0_43, %c8, %c0_44] : memref<1x32x32xbf16, #tpu.memory_space<vmem>>, vector<1x8x32xbf16>
    %87 = vector.shape_cast %86 : vector<1x8x32xbf16> to vector<8x32xbf16>
    %cst_45 = arith.constant dense<0.000000e+00> : vector<8x32xf32>
    %88 = tpu.matmul %85, %87, %cst_45 {dimension_numbers = #tpu.dot_dimension_numbers<[1], [0], [0], [1], [0, 0, 1, 1], [], []>} : vector<8x8xbf16>, vector<8x32xbf16>, vector<8x32xf32> -> vector<8x32xf32>
    %89 = arith.addf %65, %88 : vector<8x32xf32>
    %90 = vector.extract_strided_slice %36 {offsets = [0, 0, 16], sizes = [1, 8, 8], strides = [1, 1, 1]} : vector<1x8x32xbf16> to vector<1x8x8xbf16>
    %91 = vector.extract_strided_slice %38 {offsets = [0, 0, 16], sizes = [1, 8, 8], strides = [1, 1, 1]} : vector<1x8x32xbf16> to vector<1x8x8xbf16>
    %92 = vector.extract_strided_slice %40 {offsets = [0, 0, 16], sizes = [1, 8, 8], strides = [1, 1, 1]} : vector<1x8x32xbf16> to vector<1x8x8xbf16>
    "tpu.trace_start"() <{level = 10 : i32, message = "bqd,bkd->bqk"}> : () -> ()
    %cst_46 = arith.constant dense<0.000000e+00> : vector<1x8x8xf32>
    %93 = tpu.matmul %90, %91, %cst_46 {dimension_numbers = #tpu.dot_dimension_numbers<[2], [2], [1], [1], [0, 0, 0, 1, 1, 1], [0], [0]>} : vector<1x8x8xbf16>, vector<1x8x8xbf16>, vector<1x8x8xf32> -> vector<1x8x8xf32>
    "tpu.trace_stop"() : () -> ()
    %94 = vector.broadcast %11 : vector<1x1x8xf32> to vector<1x8x8xf32>
    %95 = arith.addf %93, %94 : vector<1x8x8xf32>
    %cst_47 = arith.constant dense<0xFF800000> : vector<1x8xf32>
    %96 = vector.multi_reduction <maximumf>, %95, %cst_47 [2] : vector<1x8x8xf32> to vector<1x8xf32>
    %97 = vector.shape_cast %96 : vector<1x8xf32> to vector<1x8x1xf32>
    %98 = vector.broadcast %97 : vector<1x8x1xf32> to vector<1x8x8xf32>
    %99 = arith.subf %95, %98 : vector<1x8x8xf32>
    %100 = math.exp %99 : vector<1x8x8xf32>
    %cst_48 = arith.constant dense<0.000000e+00> : vector<1x8xf32>
    %101 = vector.multi_reduction <add>, %100, %cst_48 [2] : vector<1x8x8xf32> to vector<1x8xf32>
    %102 = vector.shape_cast %101 : vector<1x8xf32> to vector<1x8x1xf32>
    %103 = tpu.reciprocal %102 {approx = true} : vector<1x8x1xf32> -> vector<1x8x1xf32>
    %104 = vector.broadcast %103 : vector<1x8x1xf32> to vector<1x8x8xf32>
    %105 = arith.mulf %100, %104 : vector<1x8x8xf32>
    %106 = arith.truncf %105 : vector<1x8x8xf32> to vector<1x8x8xbf16>
    "tpu.trace_start"() <{level = 10 : i32, message = "bqk,bkd->bqd"}> : () -> ()
    %cst_49 = arith.constant dense<0.000000e+00> : vector<1x8x8xf32>
    %107 = tpu.matmul %106, %92, %cst_49 {dimension_numbers = #tpu.dot_dimension_numbers<[2], [1], [1], [2], [0, 0, 0, 1, 1, 2], [0], [0]>} : vector<1x8x8xbf16>, vector<1x8x8xbf16>, vector<1x8x8xf32> -> vector<1x8x8xf32>
    "tpu.trace_stop"() : () -> ()
    %108 = vector.shape_cast %107 : vector<1x8x8xf32> to vector<8x8xf32>
    %109 = arith.truncf %108 : vector<8x8xf32> to vector<8x8xbf16>
    %c0_50 = arith.constant 0 : index
    %c16 = arith.constant 16 : index
    %c0_51 = arith.constant 0 : index
    %110 = vector.load %arg10[%c0_50, %c16, %c0_51] : memref<1x32x32xbf16, #tpu.memory_space<vmem>>, vector<1x8x32xbf16>
    %111 = vector.shape_cast %110 : vector<1x8x32xbf16> to vector<8x32xbf16>
    %cst_52 = arith.constant dense<0.000000e+00> : vector<8x32xf32>
    %112 = tpu.matmul %109, %111, %cst_52 {dimension_numbers = #tpu.dot_dimension_numbers<[1], [0], [0], [1], [0, 0, 1, 1], [], []>} : vector<8x8xbf16>, vector<8x32xbf16>, vector<8x32xf32> -> vector<8x32xf32>
    %113 = arith.addf %89, %112 : vector<8x32xf32>
    %114 = vector.extract_strided_slice %36 {offsets = [0, 0, 24], sizes = [1, 8, 8], strides = [1, 1, 1]} : vector<1x8x32xbf16> to vector<1x8x8xbf16>
    %115 = vector.extract_strided_slice %38 {offsets = [0, 0, 24], sizes = [1, 8, 8], strides = [1, 1, 1]} : vector<1x8x32xbf16> to vector<1x8x8xbf16>
    %116 = vector.extract_strided_slice %40 {offsets = [0, 0, 24], sizes = [1, 8, 8], strides = [1, 1, 1]} : vector<1x8x32xbf16> to vector<1x8x8xbf16>
    "tpu.trace_start"() <{level = 10 : i32, message = "bqd,bkd->bqk"}> : () -> ()
    %cst_53 = arith.constant dense<0.000000e+00> : vector<1x8x8xf32>
    %117 = tpu.matmul %114, %115, %cst_53 {dimension_numbers = #tpu.dot_dimension_numbers<[2], [2], [1], [1], [0, 0, 0, 1, 1, 1], [0], [0]>} : vector<1x8x8xbf16>, vector<1x8x8xbf16>, vector<1x8x8xf32> -> vector<1x8x8xf32>
    "tpu.trace_stop"() : () -> ()
    %118 = vector.broadcast %11 : vector<1x1x8xf32> to vector<1x8x8xf32>
    %119 = arith.addf %117, %118 : vector<1x8x8xf32>
    %cst_54 = arith.constant dense<0xFF800000> : vector<1x8xf32>
    %120 = vector.multi_reduction <maximumf>, %119, %cst_54 [2] : vector<1x8x8xf32> to vector<1x8xf32>
    %121 = vector.shape_cast %120 : vector<1x8xf32> to vector<1x8x1xf32>
    %122 = vector.broadcast %121 : vector<1x8x1xf32> to vector<1x8x8xf32>
    %123 = arith.subf %119, %122 : vector<1x8x8xf32>
    %124 = math.exp %123 : vector<1x8x8xf32>
    %cst_55 = arith.constant dense<0.000000e+00> : vector<1x8xf32>
    %125 = vector.multi_reduction <add>, %124, %cst_55 [2] : vector<1x8x8xf32> to vector<1x8xf32>
    %126 = vector.shape_cast %125 : vector<1x8xf32> to vector<1x8x1xf32>
    %127 = tpu.reciprocal %126 {approx = true} : vector<1x8x1xf32> -> vector<1x8x1xf32>
    %128 = vector.broadcast %127 : vector<1x8x1xf32> to vector<1x8x8xf32>
    %129 = arith.mulf %124, %128 : vector<1x8x8xf32>
    %130 = arith.truncf %129 : vector<1x8x8xf32> to vector<1x8x8xbf16>
    "tpu.trace_start"() <{level = 10 : i32, message = "bqk,bkd->bqd"}> : () -> ()
    %cst_56 = arith.constant dense<0.000000e+00> : vector<1x8x8xf32>
    %131 = tpu.matmul %130, %116, %cst_56 {dimension_numbers = #tpu.dot_dimension_numbers<[2], [1], [1], [2], [0, 0, 0, 1, 1, 2], [0], [0]>} : vector<1x8x8xbf16>, vector<1x8x8xbf16>, vector<1x8x8xf32> -> vector<1x8x8xf32>
    "tpu.trace_stop"() : () -> ()
    %132 = vector.shape_cast %131 : vector<1x8x8xf32> to vector<8x8xf32>
    %133 = arith.truncf %132 : vector<8x8xf32> to vector<8x8xbf16>
    %c0_57 = arith.constant 0 : index
    %c24 = arith.constant 24 : index
    %c0_58 = arith.constant 0 : index
    %134 = vector.load %arg10[%c0_57, %c24, %c0_58] : memref<1x32x32xbf16, #tpu.memory_space<vmem>>, vector<1x8x32xbf16>
    %135 = vector.shape_cast %134 : vector<1x8x32xbf16> to vector<8x32xbf16>
    %cst_59 = arith.constant dense<0.000000e+00> : vector<8x32xf32>
    %136 = tpu.matmul %133, %135, %cst_59 {dimension_numbers = #tpu.dot_dimension_numbers<[1], [0], [0], [1], [0, 0, 1, 1], [], []>} : vector<8x8xbf16>, vector<8x32xbf16>, vector<8x32xf32> -> vector<8x32xf32>
    %137 = arith.addf %113, %136 : vector<8x32xf32>
    %138 = arith.addf %4, %137 : vector<8x32xf32>
    %c0_60 = arith.constant 0 : index
    %c0_61 = arith.constant 0 : index
    %c0_62 = arith.constant 0 : index
    %139 = vector.load %arg11[%c0_60, %c0_61, %c0_62] : memref<1x1x32xf32, #tpu.memory_space<vmem>>, vector<1x1x32xf32>
    %140 = vector.shape_cast %139 : vector<1x1x32xf32> to vector<1x32xf32>
    %141 = vector.broadcast %140 : vector<1x32xf32> to vector<8x32xf32>
    %142 = arith.addf %138, %141 : vector<8x32xf32>
    %cst_63 = arith.constant dense<0.000000e+00> : vector<8xf32>
    %143 = vector.multi_reduction <add>, %142, %cst_63 [1] : vector<8x32xf32> to vector<8xf32>
    %144 = vector.shape_cast %143 : vector<8xf32> to vector<8x1xf32>
    %cst_64 = arith.constant 3.200000e+01 : f32
    %145 = vector.broadcast %cst_64 : f32 to vector<8x1xf32>
    %146 = arith.divf %144, %145 : vector<8x1xf32>
    %147 = vector.broadcast %146 : vector<8x1xf32> to vector<8x32xf32>
    %148 = arith.subf %142, %147 : vector<8x32xf32>
    %149 = arith.mulf %148, %148 : vector<8x32xf32>
    %cst_65 = arith.constant dense<0.000000e+00> : vector<8xf32>
    %150 = vector.multi_reduction <add>, %149, %cst_65 [1] : vector<8x32xf32> to vector<8xf32>
    %151 = vector.shape_cast %150 : vector<8xf32> to vector<8x1xf32>
    %cst_66 = arith.constant 3.200000e+01 : f32
    %152 = vector.broadcast %cst_66 : f32 to vector<8x1xf32>
    %153 = arith.divf %151, %152 : vector<8x1xf32>
    %154 = vector.broadcast %146 : vector<8x1xf32> to vector<8x32xf32>
    %155 = arith.subf %142, %154 : vector<8x32xf32>
    %cst_67 = arith.constant 9.99999974E-6 : f32
    %156 = vector.broadcast %cst_67 : f32 to vector<8x1xf32>
    %157 = arith.addf %153, %156 : vector<8x1xf32>
    %158 = math.rsqrt %157 : vector<8x1xf32>
    %159 = vector.broadcast %158 : vector<8x1xf32> to vector<8x32xf32>
    %160 = arith.mulf %155, %159 : vector<8x32xf32>
    %c0_68 = arith.constant 0 : index
    %c0_69 = arith.constant 0 : index
    %c0_70 = arith.constant 0 : index
    %161 = vector.load %arg12[%c0_68, %c0_69, %c0_70] : memref<1x1x32xf32, #tpu.memory_space<vmem>>, vector<1x1x32xf32>
    %162 = vector.shape_cast %161 : vector<1x1x32xf32> to vector<1x32xf32>
    %163 = vector.broadcast %162 : vector<1x32xf32> to vector<8x32xf32>
    %164 = arith.mulf %160, %163 : vector<8x32xf32>
    %c0_71 = arith.constant 0 : index
    %c0_72 = arith.constant 0 : index
    %c0_73 = arith.constant 0 : index
    %165 = vector.load %arg13[%c0_71, %c0_72, %c0_73] : memref<1x1x32xf32, #tpu.memory_space<vmem>>, vector<1x1x32xf32>
    %166 = vector.shape_cast %165 : vector<1x1x32xf32> to vector<1x32xf32>
    %167 = vector.broadcast %166 : vector<1x32xf32> to vector<8x32xf32>
    %168 = arith.addf %164, %167 : vector<8x32xf32>
    %169 = arith.truncf %168 : vector<8x32xf32> to vector<8x32xbf16>
    %cst_74 = arith.constant 0.000000e+00 : f32
    %170 = vector.broadcast %cst_74 : f32 to vector<8x32xf32>
    %c0_75 = arith.constant 0 : index
    %c0_76 = arith.constant 0 : index
    %c0_77 = arith.constant 0 : index
    %171 = vector.load %arg14[%c0_75, %c0_76, %c0_77] : memref<1x32x128xbf16, #tpu.memory_space<vmem>>, vector<1x32x128xbf16>
    %172 = vector.shape_cast %171 : vector<1x32x128xbf16> to vector<32x128xbf16>
    %cst_78 = arith.constant dense<0.000000e+00> : vector<8x128xf32>
    %173 = tpu.matmul %169, %172, %cst_78 {dimension_numbers = #tpu.dot_dimension_numbers<[1], [0], [0], [1], [0, 0, 1, 1], [], []>} : vector<8x32xbf16>, vector<32x128xbf16>, vector<8x128xf32> -> vector<8x128xf32>
    %c0_79 = arith.constant 0 : index
    %c0_80 = arith.constant 0 : index
    %c0_81 = arith.constant 0 : index
    %174 = vector.load %arg15[%c0_79, %c0_80, %c0_81] : memref<1x1x128xf32, #tpu.memory_space<vmem>>, vector<1x1x128xf32>
    %175 = vector.shape_cast %174 : vector<1x1x128xf32> to vector<1x128xf32>
    %176 = vector.broadcast %175 : vector<1x128xf32> to vector<8x128xf32>
    %177 = arith.addf %173, %176 : vector<8x128xf32>
    %cst_82 = arith.constant 0.000000e+00 : f32
    %178 = vector.broadcast %cst_82 : f32 to vector<8x128xf32>
    %179 = arith.maximumf %177, %178 : vector<8x128xf32>
    %180 = arith.truncf %179 : vector<8x128xf32> to vector<8x128xbf16>
    %c0_83 = arith.constant 0 : index
    %c0_84 = arith.constant 0 : index
    %c0_85 = arith.constant 0 : index
    %181 = vector.load %arg16[%c0_83, %c0_84, %c0_85] : memref<1x128x32xbf16, #tpu.memory_space<vmem>>, vector<1x128x32xbf16>
    %182 = vector.shape_cast %181 : vector<1x128x32xbf16> to vector<128x32xbf16>
    %cst_86 = arith.constant dense<0.000000e+00> : vector<8x32xf32>
    %183 = tpu.matmul %180, %182, %cst_86 {dimension_numbers = #tpu.dot_dimension_numbers<[1], [0], [0], [1], [0, 0, 1, 1], [], []>} : vector<8x128xbf16>, vector<128x32xbf16>, vector<8x32xf32> -> vector<8x32xf32>
    %184 = arith.addf %170, %183 : vector<8x32xf32>
    %185 = arith.addf %168, %184 : vector<8x32xf32>
    %c0_87 = arith.constant 0 : index
    %c0_88 = arith.constant 0 : index
    %c0_89 = arith.constant 0 : index
    %186 = vector.load %arg17[%c0_87, %c0_88, %c0_89] : memref<1x1x32xf32, #tpu.memory_space<vmem>>, vector<1x1x32xf32>
    %187 = vector.shape_cast %186 : vector<1x1x32xf32> to vector<1x32xf32>
    %188 = vector.broadcast %187 : vector<1x32xf32> to vector<8x32xf32>
    %189 = arith.addf %185, %188 : vector<8x32xf32>
    %cst_90 = arith.constant dense<0.000000e+00> : vector<8xf32>
    %190 = vector.multi_reduction <add>, %189, %cst_90 [1] : vector<8x32xf32> to vector<8xf32>
    %191 = vector.shape_cast %190 : vector<8xf32> to vector<8x1xf32>
    %cst_91 = arith.constant 3.200000e+01 : f32
    %192 = vector.broadcast %cst_91 : f32 to vector<8x1xf32>
    %193 = arith.divf %191, %192 : vector<8x1xf32>
    %194 = vector.broadcast %193 : vector<8x1xf32> to vector<8x32xf32>
    %195 = arith.subf %189, %194 : vector<8x32xf32>
    %196 = arith.mulf %195, %195 : vector<8x32xf32>
    %cst_92 = arith.constant dense<0.000000e+00> : vector<8xf32>
    %197 = vector.multi_reduction <add>, %196, %cst_92 [1] : vector<8x32xf32> to vector<8xf32>
    %198 = vector.shape_cast %197 : vector<8xf32> to vector<8x1xf32>
    %cst_93 = arith.constant 3.200000e+01 : f32
    %199 = vector.broadcast %cst_93 : f32 to vector<8x1xf32>
    %200 = arith.divf %198, %199 : vector<8x1xf32>
    %201 = vector.broadcast %193 : vector<8x1xf32> to vector<8x32xf32>
    %202 = arith.subf %189, %201 : vector<8x32xf32>
    %cst_94 = arith.constant 9.99999974E-6 : f32
    %203 = vector.broadcast %cst_94 : f32 to vector<8x1xf32>
    %204 = arith.addf %200, %203 : vector<8x1xf32>
    %205 = math.rsqrt %204 : vector<8x1xf32>
    %206 = vector.broadcast %205 : vector<8x1xf32> to vector<8x32xf32>
    %207 = arith.mulf %202, %206 : vector<8x32xf32>
    %c0_95 = arith.constant 0 : index
    %c0_96 = arith.constant 0 : index
    %c0_97 = arith.constant 0 : index
    %208 = vector.load %arg18[%c0_95, %c0_96, %c0_97] : memref<1x1x32xf32, #tpu.memory_space<vmem>>, vector<1x1x32xf32>
    %209 = vector.shape_cast %208 : vector<1x1x32xf32> to vector<1x32xf32>
    %210 = vector.broadcast %209 : vector<1x32xf32> to vector<8x32xf32>
    %211 = arith.mulf %207, %210 : vector<8x32xf32>
    %c0_98 = arith.constant 0 : index
    %c0_99 = arith.constant 0 : index
    %c0_100 = arith.constant 0 : index
    %212 = vector.load %arg19[%c0_98, %c0_99, %c0_100] : memref<1x1x32xf32, #tpu.memory_space<vmem>>, vector<1x1x32xf32>
    %213 = vector.shape_cast %212 : vector<1x1x32xf32> to vector<1x32xf32>
    %214 = vector.broadcast %213 : vector<1x32xf32> to vector<8x32xf32>
    %215 = arith.addf %211, %214 : vector<8x32xf32>
    %216 = vector.shape_cast %215 : vector<8x32xf32> to vector<1x8x32xf32>
    %c0_101 = arith.constant 0 : index
    %c0_102 = arith.constant 0 : index
    %c0_103 = arith.constant 0 : index
    %217 = vector.load %arg20[%c0_101, %c0_102, %c0_103] : memref<1x8x32xf32, #tpu.memory_space<vmem>>, vector<1x8x32xf32>
    tpu.vector_store %arg20[%c0_101, %c0_102, %c0_103], %216 {strides = array<i32>} : memref<1x8x32xf32, #tpu.memory_space<vmem>>, vector<1x8x32xf32>,
    return
  }
  func.func @transform_0(%arg0: i32, %arg1: i32) -> (i32, i32, i32) {
    %c0_i32 = arith.constant 0 : i32
    %c0_i32_0 = arith.constant 0 : i32
    %c0_i32_1 = arith.constant 0 : i32
    return %arg0, %c0_i32, %c0_i32_0 : i32, i32, i32
  }
  func.func @transform_1(%arg0: i32, %arg1: i32) -> (i32, i32, i32) {
    %c0_i32 = arith.constant 0 : i32
    %c0_i32_0 = arith.constant 0 : i32
    %c0_i32_1 = arith.constant 0 : i32
    return %arg0, %c0_i32, %c0_i32_0 : i32, i32, i32
  }
  func.func @transform_2(%arg0: i32, %arg1: i32) -> (i32, i32, i32) {
    %c0_i32 = arith.constant 0 : i32
    %c0_i32_0 = arith.constant 0 : i32
    %c0_i32_1 = arith.constant 0 : i32
    return %arg1, %c0_i32, %c0_i32_0 : i32, i32, i32
  }
  func.func @transform_3(%arg0: i32, %arg1: i32) -> (i32, i32, i32) {
    %c0_i32 = arith.constant 0 : i32
    %c0_i32_0 = arith.constant 0 : i32
    %c0_i32_1 = arith.constant 0 : i32
    return %arg1, %c0_i32, %c0_i32_0 : i32, i32, i32
  }
  func.func @transform_4(%arg0: i32, %arg1: i32) -> (i32, i32, i32) {
    %c0_i32 = arith.constant 0 : i32
    %c0_i32_0 = arith.constant 0 : i32
    %c0_i32_1 = arith.constant 0 : i32
    return %arg1, %c0_i32, %c0_i32_0 : i32, i32, i32
  }
  func.func @transform_5(%arg0: i32, %arg1: i32) -> (i32, i32, i32) {
    %c0_i32 = arith.constant 0 : i32
    %c0_i32_0 = arith.constant 0 : i32
    %c0_i32_1 = arith.constant 0 : i32
    return %arg1, %c0_i32, %c0_i32_0 : i32, i32, i32
  }
  func.func @transform_6(%arg0: i32, %arg1: i32) -> (i32, i32, i32) {
    %c0_i32 = arith.constant 0 : i32
    %c0_i32_0 = arith.constant 0 : i32
    %c0_i32_1 = arith.constant 0 : i32
    return %arg1, %c0_i32, %c0_i32_0 : i32, i32, i32
  }
  func.func @transform_7(%arg0: i32, %arg1: i32) -> (i32, i32, i32) {
    %c0_i32 = arith.constant 0 : i32
    %c0_i32_0 = arith.constant 0 : i32
    %c0_i32_1 = arith.constant 0 : i32
    return %arg1, %c0_i32, %c0_i32_0 : i32, i32, i32
  }
  func.func @transform_8(%arg0: i32, %arg1: i32) -> (i32, i32, i32) {
    %c0_i32 = arith.constant 0 : i32
    %c0_i32_0 = arith.constant 0 : i32
    %c0_i32_1 = arith.constant 0 : i32
    return %arg1, %c0_i32, %c0_i32_0 : i32, i32, i32
  }
  func.func @transform_9(%arg0: i32, %arg1: i32) -> (i32, i32, i32) {
    %c0_i32 = arith.constant 0 : i32
    %c0_i32_0 = arith.constant 0 : i32
    %c0_i32_1 = arith.constant 0 : i32
    return %arg1, %c0_i32, %c0_i32_0 : i32, i32, i32
  }
  func.func @transform_10(%arg0: i32, %arg1: i32) -> (i32, i32, i32) {
    %c0_i32 = arith.constant 0 : i32
    %c0_i32_0 = arith.constant 0 : i32
    %c0_i32_1 = arith.constant 0 : i32
    return %arg1, %c0_i32, %c0_i32_0 : i32, i32, i32
  }
  func.func @transform_11(%arg0: i32, %arg1: i32) -> (i32, i32, i32) {
    %c0_i32 = arith.constant 0 : i32
    %c0_i32_0 = arith.constant 0 : i32
    %c0_i32_1 = arith.constant 0 : i32
    return %arg1, %c0_i32, %c0_i32_0 : i32, i32, i32
  }
  func.func @transform_12(%arg0: i32, %arg1: i32) -> (i32, i32, i32) {
    %c0_i32 = arith.constant 0 : i32
    %c0_i32_0 = arith.constant 0 : i32
    %c0_i32_1 = arith.constant 0 : i32
    return %arg1, %c0_i32, %c0_i32_0 : i32, i32, i32
  }
  func.func @transform_13(%arg0: i32, %arg1: i32) -> (i32, i32, i32) {
    %c0_i32 = arith.constant 0 : i32
    %c0_i32_0 = arith.constant 0 : i32
    %c0_i32_1 = arith.constant 0 : i32
    return %arg1, %c0_i32, %c0_i32_0 : i32, i32, i32
  }
  func.func @transform_14(%arg0: i32, %arg1: i32) -> (i32, i32, i32) {
    %c0_i32 = arith.constant 0 : i32
    %c0_i32_0 = arith.constant 0 : i32
    %c0_i32_1 = arith.constant 0 : i32
    return %arg1, %c0_i32, %c0_i32_0 : i32, i32, i32
  }
  func.func @transform_15(%arg0: i32, %arg1: i32) -> (i32, i32, i32) {
    %c0_i32 = arith.constant 0 : i32
    %c0_i32_0 = arith.constant 0 : i32
    %c0_i32_1 = arith.constant 0 : i32
    return %arg1, %c0_i32, %c0_i32_0 : i32, i32, i32
  }
  func.func @transform_16(%arg0: i32, %arg1: i32) -> (i32, i32, i32) {
    %c0_i32 = arith.constant 0 : i32
    %c0_i32_0 = arith.constant 0 : i32
    %c0_i32_1 = arith.constant 0 : i32
    return %arg1, %c0_i32, %c0_i32_0 : i32, i32, i32
  }
  func.func @transform_17(%arg0: i32, %arg1: i32) -> (i32, i32, i32) {
    %c0_i32 = arith.constant 0 : i32
    %c0_i32_0 = arith.constant 0 : i32
    %c0_i32_1 = arith.constant 0 : i32
    return %arg1, %c0_i32, %c0_i32_0 : i32, i32, i32
  }
  func.func @transform_18(%arg0: i32, %arg1: i32) -> (i32, i32, i32) {
    %c0_i32 = arith.constant 0 : i32
    %c0_i32_0 = arith.constant 0 : i32
    %c0_i32_1 = arith.constant 0 : i32
    return %arg0, %c0_i32, %c0_i32_0 : i32, i32, i32
  }
}

</mosaic_0001>

<llo_original>
// kernel: tpu_custom_call.1
$region0: #{tpu_custom_call.1}
  #allocation0 [shape = 'u32[]', space=smem, size = 0x4, offset = 0x4, fixed_abs, tag = 'smem constant byte address 0x4 - core index']
  #allocation1 [shape = 'u32[144,128]{1,0:T(1,128)}', space=vmem, size = 0x12000, scoped, tag = 'internal scratch']
  %s0 = inlined_call_operand.hbm [shape: f32[2,1,8], index: 0, kind: input, shape index: {}]
  %s1 = inlined_call_operand.hbm [shape: f32[2,8,32], index: 1, kind: input, shape index: {}]
  %s2 = inlined_call_operand.vmem [shape: bf16[2,32,32], index: 2, kind: input, shape index: {}]
  %s3 = inlined_call_operand.vmem [shape: f32[2,1,32], index: 3, kind: input, shape index: {}]
  %s4 = inlined_call_operand.vmem [shape: bf16[2,32,32], index: 4, kind: input, shape index: {}]
  %s5 = inlined_call_operand.vmem [shape: f32[2,1,32], index: 5, kind: input, shape index: {}]
  %s6 = inlined_call_operand.vmem [shape: bf16[2,32,32], index: 6, kind: input, shape index: {}]
  %s7 = inlined_call_operand.vmem [shape: f32[2,1,32], index: 7, kind: input, shape index: {}]
  %s8 = inlined_call_operand.vmem [shape: bf16[2,32,32], index: 8, kind: input, shape index: {}]
  %s9 = inlined_call_operand.vmem [shape: f32[2,1,32], index: 9, kind: input, shape index: {}]
  %s10 = inlined_call_operand.vmem [shape: f32[2,1,32], index: 10, kind: input, shape index: {}]
  %s11 = inlined_call_operand.vmem [shape: f32[2,1,32], index: 11, kind: input, shape index: {}]
  %s12 = inlined_call_operand.vmem [shape: bf16[2,32,128], index: 12, kind: input, shape index: {}]
  %s13 = inlined_call_operand.vmem [shape: f32[2,1,128], index: 13, kind: input, shape index: {}]
  %s14 = inlined_call_operand.vmem [shape: bf16[2,128,32], index: 14, kind: input, shape index: {}]
  %s15 = inlined_call_operand.vmem [shape: f32[2,1,32], index: 15, kind: input, shape index: {}]
  %s16 = inlined_call_operand.vmem [shape: f32[2,1,32], index: 16, kind: input, shape index: {}]
  %s17 = inlined_call_operand.vmem [shape: f32[2,1,32], index: 17, kind: input, shape index: {}]
  %s18 = inlined_call_operand.hbm [shape: f32[2,8,32], index: 18, kind: output, shape index: {}]
  %s19 = sld [smem:[#allocation0]]
  $region117: #{tpu_custom_call.1} parent=0
    _
  %s21 = ssub.s32 1, %s19
  %s22 = scalar_select 0, %s21, %s19
  $region1: #{tpu_custom_call.1} parent=0
    #allocation2 [shape = 'u8[1024]{0}', space=vmem, size = 0x400, scoped, tag = 'input window, operand 0']
    #allocation3 [shape = 's32[2]{0}', space=sflag, size = 0x8, scoped, tag = 'scoped memory for tpu_custom_call.1']
    #allocation4 [shape = 's32[2]{0}', space=sflag, size = 0x8, scoped, tag = 'scoped memory for tpu_custom_call.1']
    #allocation5 [shape = 'u8[8192]{0}', space=vmem, size = 0x2000, scoped, tag = 'input window, operand 1']
    #allocation6 [shape = 's32[2]{0}', space=sflag, size = 0x8, scoped, tag = 'scoped memory for tpu_custom_call.1']
    #allocation7 [shape = 'u8[8192]{0}', space=vmem, size = 0x2000, scoped, tag = 'output window, operand 0']
    %23 = vsyncpa [#allocation3], 0
    %s24 = scalar_lea.sflag [#allocation3], 1
    %25 = vsyncpa %s24, 0
    %26 = vsyncpa [#allocation6], 0
    %s27 = scalar_lea.sflag [#allocation6], 1
    %28 = vsyncpa %s27, 0
    %29 = vsyncpa [#allocation4], 0
    %s30 = scalar_lea.sflag [#allocation4], 1
    %31 = vsyncpa %s30, 0
    loop: start=0, step=1, limit=6
    $region2: #{tpu_custom_call.1} parent=1 // loop_pre_header
      _
    $region3: #{tpu_custom_call.1} parent=1 // loop_header
      %s33 = sphi 0, %s37
      %p34 = scmp.ge.s32.totalorder %s33, 6
      %s40 = sphi 0, %s52
      %s41 = sphi 0, %s48
      %s42 = sphi 0, %s40
      %s43 = sphi 0, %s41
      %s44 = sphi 0, %s42
      %s45 = sphi 0, %s43
      %s55 = sphi 0, %s57
      %s58 = sphi 0, %s55
      %s59 = sphi 0, %s58
      %s75 = sphi 0, %s59
      %s81 = sphi 0, %s83
      %s84 = sphi 0, %s81
      %s85 = sphi 0, %s84
      %s101 = sphi 0, %s85
      %s107 = sphi 0, %s109
      %s110 = sphi 0, %s107
      %s111 = sphi 0, %s110
      %s127 = sphi 0, %s111
      %s133 = sphi 0, %s135
      %s136 = sphi 0, %s133
      %s137 = sphi 0, %s136
      %s153 = sphi 0, %s137
      %s159 = sphi 0, %s161
      %s162 = sphi 0, %s159
      %s163 = sphi 0, %s162
      %s179 = sphi 0, %s163
      %s185 = sphi 0, %s187
      %s188 = sphi 0, %s185
      %s189 = sphi 0, %s188
      %s205 = sphi 0, %s189
      %s211 = sphi 0, %s213
      %s214 = sphi 0, %s211
      %s215 = sphi 0, %s214
      %s231 = sphi 0, %s215
      %s237 = sphi 0, %s239
      %s240 = sphi 0, %s237
      %s241 = sphi 0, %s240
      %s257 = sphi 0, %s241
      %s263 = sphi 0, %s265
      %s266 = sphi 0, %s263
      %s267 = sphi 0, %s266
      %s283 = sphi 0, %s267
      %s289 = sphi 0, %s291
      %s292 = sphi 0, %s289
      %s293 = sphi 0, %s292
      %s309 = sphi 0, %s293
      %s315 = sphi 0, %s317
      %s318 = sphi 0, %s315
      %s319 = sphi 0, %s318
      %s335 = sphi 0, %s319
      %s341 = sphi 0, %s343
      %s344 = sphi 0, %s341
      %s345 = sphi 0, %s344
      %s361 = sphi 0, %s345
      %s367 = sphi 0, %s369
      %s370 = sphi 0, %s367
      %s371 = sphi 0, %s370
      %s387 = sphi 0, %s371
      %s393 = sphi 0, %s395
      %s396 = sphi 0, %s393
      %s397 = sphi 0, %s396
      %s413 = sphi 0, %s397
      %s419 = sphi 0, %s421
      %s422 = sphi 0, %s419
      %s423 = sphi 0, %s422
      %s439 = sphi 0, %s423
      %s445 = sphi 0, %s447
      %s448 = sphi 0, %s445
      %s449 = sphi 0, %s448
      %s465 = sphi 0, %s449
      %s471 = sphi 0, %s473
      %s474 = sphi 0, %s471
      %s475 = sphi 0, %s474
      %s491 = sphi 0, %s475
      %s497 = sphi 0, %s499
      %s500 = sphi 0, %s497
      %s501 = sphi 0, %s500
      %s517 = sphi 0, %s501
      %s523 = sphi 0, %s525
      %s526 = sphi 0, %s523
      %s527 = sphi 0, %s526
      %s543 = sphi 0, %s527
    $region4: #{tpu_custom_call.1} parent=1 // loop_header_branch
      %36 = sbr.rel (%p34) target = $region8
    $region5: #{tpu_custom_call.1} parent=1 // loop_body
      %s38 = ssub.s32 %s33, 1
      %s39 = ssub.s32 %s33, 2
      %s46 = sadd.s32 1, %s41
      %p47 = scmp.ge.s32.totalorder %s46, 2
      %s48 = scalar_select %p47, 0, %s46
      %s49 = sadd.s32 1, %s40
      %s50 = scalar_select %p47, %s49, %s40
      %p51 = scmp.ge.s32.totalorder %s50, 2
      %s52 = scalar_select %p51, 0, %s50
      %s53 = ssub.s32 %s40, %s52
      %p54 = scmp.eq.s32.totalorder %s53, 0
      %s56 = sadd.s32 %s55, 1
      %s57 = scalar_select %p54, %s55, %s56
      %p60 = pneg %p54
      %p61 = scmp.eq.s32.totalorder %s33, 3
      %p62 = por %p60, %p61
      %p63 = scmp.ne.s32.totalorder %s55, %s58
      %p64 = scmp.eq.s32.totalorder %s33, 0
      %p65 = por %p63, %p64
      %p66 = scmp.ne.s32.totalorder %s55, %s58
      %p67 = scmp.eq.s32.totalorder %s38, 3
      %p68 = por %p66, %p67
      %p69 = scmp.ne.s32.totalorder %s58, %s59
      %p70 = scmp.eq.s32.totalorder %s38, 0
      %p71 = por %p69, %p70
      %p72 = scmp.ne.s32.totalorder %s58, %s59
      %p73 = scmp.eq.s32.totalorder %s39, 3
      %p74 = por %p72, %p73
      %p76 = scmp.ne.s32.totalorder %s59, %s75
      %p77 = scmp.eq.s32.totalorder %s39, 0
      %p78 = por %p76, %p77
      %s79 = ssub.s32 %s40, %s52
      %p80 = scmp.eq.s32.totalorder %s79, 0
      %s82 = sadd.s32 %s81, 1
      %s83 = scalar_select %p80, %s81, %s82
      %p86 = pneg %p80
      %p87 = scmp.eq.s32.totalorder %s33, 3
      %p88 = por %p86, %p87
      %p89 = scmp.ne.s32.totalorder %s81, %s84
      %p90 = scmp.eq.s32.totalorder %s33, 0
      %p91 = por %p89, %p90
      %p92 = scmp.ne.s32.totalorder %s81, %s84
      %p93 = scmp.eq.s32.totalorder %s38, 3
      %p94 = por %p92, %p93
      %p95 = scmp.ne.s32.totalorder %s84, %s85
      %p96 = scmp.eq.s32.totalorder %s38, 0
      %p97 = por %p95, %p96
      %p98 = scmp.ne.s32.totalorder %s84, %s85
      %p99 = scmp.eq.s32.totalorder %s39, 3
      %p100 = por %p98, %p99
      %p102 = scmp.ne.s32.totalorder %s85, %s101
      %p103 = scmp.eq.s32.totalorder %s39, 0
      %p104 = por %p102, %p103
      %s105 = ssub.s32 %s41, %s48
      %p106 = scmp.eq.s32.totalorder %s105, 0
      %s108 = sadd.s32 %s107, 1
      %s109 = scalar_select %p106, %s107, %s108
      %p112 = pneg %p106
      %p113 = scmp.eq.s32.totalorder %s33, 3
      %p114 = por %p112, %p113
      %p115 = scmp.ne.s32.totalorder %s107, %s110
      %p116 = scmp.eq.s32.totalorder %s33, 0
      %p117 = por %p115, %p116
      %p118 = scmp.ne.s32.totalorder %s107, %s110
      %p119 = scmp.eq.s32.totalorder %s38, 3
      %p120 = por %p118, %p119
      %p121 = scmp.ne.s32.totalorder %s110, %s111
      %p122 = scmp.eq.s32.totalorder %s38, 0
      %p123 = por %p121, %p122
      %p124 = scmp.ne.s32.totalorder %s110, %s111
      %p125 = scmp.eq.s32.totalorder %s39, 3
      %p126 = por %p124, %p125
      %p128 = scmp.ne.s32.totalorder %s111, %s127
      %p129 = scmp.eq.s32.totalorder %s39, 0
      %p130 = por %p128, %p129
      %s131 = ssub.s32 %s41, %s48
      %p132 = scmp.eq.s32.totalorder %s131, 0
      %s134 = sadd.s32 %s133, 1
      %s135 = scalar_select %p132, %s133, %s134
      %p138 = pneg %p132
      %p139 = scmp.eq.s32.totalorder %s33, 3
      %p140 = por %p138, %p139
      %p141 = scmp.ne.s32.totalorder %s133, %s136
      %p142 = scmp.eq.s32.totalorder %s33, 0
      %p143 = por %p141, %p142
      %p144 = scmp.ne.s32.totalorder %s133, %s136
      %p145 = scmp.eq.s32.totalorder %s38, 3
      %p146 = por %p144, %p145
      %p147 = scmp.ne.s32.totalorder %s136, %s137
      %p148 = scmp.eq.s32.totalorder %s38, 0
      %p149 = por %p147, %p148
      %p150 = scmp.ne.s32.totalorder %s136, %s137
      %p151 = scmp.eq.s32.totalorder %s39, 3
      %p152 = por %p150, %p151
      %p154 = scmp.ne.s32.totalorder %s137, %s153
      %p155 = scmp.eq.s32.totalorder %s39, 0
      %p156 = por %p154, %p155
      %s157 = ssub.s32 %s41, %s48
      %p158 = scmp.eq.s32.totalorder %s157, 0
      %s160 = sadd.s32 %s159, 1
      %s161 = scalar_select %p158, %s159, %s160
      %p164 = pneg %p158
      %p165 = scmp.eq.s32.totalorder %s33, 3
      %p166 = por %p164, %p165
      %p167 = scmp.ne.s32.totalorder %s159, %s162
      %p168 = scmp.eq.s32.totalorder %s33, 0
      %p169 = por %p167, %p168
      %p170 = scmp.ne.s32.totalorder %s159, %s162
      %p171 = scmp.eq.s32.totalorder %s38, 3
      %p172 = por %p170, %p171
      %p173 = scmp.ne.s32.totalorder %s162, %s163
      %p174 = scmp.eq.s32.totalorder %s38, 0
      %p175 = por %p173, %p174
      %p176 = scmp.ne.s32.totalorder %s162, %s163
      %p177 = scmp.eq.s32.totalorder %s39, 3
      %p178 = por %p176, %p177
      %p180 = scmp.ne.s32.totalorder %s163, %s179
      %p181 = scmp.eq.s32.totalorder %s39, 0
      %p182 = por %p180, %p181
      %s183 = ssub.s32 %s41, %s48
      %p184 = scmp.eq.s32.totalorder %s183, 0
      %s186 = sadd.s32 %s185, 1
      %s187 = scalar_select %p184, %s185, %s186
      %p190 = pneg %p184
      %p191 = scmp.eq.s32.totalorder %s33, 3
      %p192 = por %p190, %p191
      %p193 = scmp.ne.s32.totalorder %s185, %s188
      %p194 = scmp.eq.s32.totalorder %s33, 0
      %p195 = por %p193, %p194
      %p196 = scmp.ne.s32.totalorder %s185, %s188
      %p197 = scmp.eq.s32.totalorder %s38, 3
      %p198 = por %p196, %p197
      %p199 = scmp.ne.s32.totalorder %s188, %s189
      %p200 = scmp.eq.s32.totalorder %s38, 0
      %p201 = por %p199, %p200
      %p202 = scmp.ne.s32.totalorder %s188, %s189
      %p203 = scmp.eq.s32.totalorder %s39, 3
      %p204 = por %p202, %p203
      %p206 = scmp.ne.s32.totalorder %s189, %s205
      %p207 = scmp.eq.s32.totalorder %s39, 0
      %p208 = por %p206, %p207
      %s209 = ssub.s32 %s41, %s48
      %p210 = scmp.eq.s32.totalorder %s209, 0
      %s212 = sadd.s32 %s211, 1
      %s213 = scalar_select %p210, %s211, %s212
      %p216 = pneg %p210
      %p217 = scmp.eq.s32.totalorder %s33, 3
      %p218 = por %p216, %p217
      %p219 = scmp.ne.s32.totalorder %s211, %s214
      %p220 = scmp.eq.s32.totalorder %s33, 0
      %p221 = por %p219, %p220
      %p222 = scmp.ne.s32.totalorder %s211, %s214
      %p223 = scmp.eq.s32.totalorder %s38, 3
      %p224 = por %p222, %p223
      %p225 = scmp.ne.s32.totalorder %s214, %s215
      %p226 = scmp.eq.s32.totalorder %s38, 0
      %p227 = por %p225, %p226
      %p228 = scmp.ne.s32.totalorder %s214, %s215
      %p229 = scmp.eq.s32.totalorder %s39, 3
      %p230 = por %p228, %p229
      %p232 = scmp.ne.s32.totalorder %s215, %s231
      %p233 = scmp.eq.s32.totalorder %s39, 0
      %p234 = por %p232, %p233
      %s235 = ssub.s32 %s41, %s48
      %p236 = scmp.eq.s32.totalorder %s235, 0
      %s238 = sadd.s32 %s237, 1
      %s239 = scalar_select %p236, %s237, %s238
      %p242 = pneg %p236
      %p243 = scmp.eq.s32.totalorder %s33, 3
      %p244 = por %p242, %p243
      %p245 = scmp.ne.s32.totalorder %s237, %s240
      %p246 = scmp.eq.s32.totalorder %s33, 0
      %p247 = por %p245, %p246
      %p248 = scmp.ne.s32.totalorder %s237, %s240
      %p249 = scmp.eq.s32.totalorder %s38, 3
      %p250 = por %p248, %p249
      %p251 = scmp.ne.s32.totalorder %s240, %s241
      %p252 = scmp.eq.s32.totalorder %s38, 0
      %p253 = por %p251, %p252
      %p254 = scmp.ne.s32.totalorder %s240, %s241
      %p255 = scmp.eq.s32.totalorder %s39, 3
      %p256 = por %p254, %p255
      %p258 = scmp.ne.s32.totalorder %s241, %s257
      %p259 = scmp.eq.s32.totalorder %s39, 0
      %p260 = por %p258, %p259
      %s261 = ssub.s32 %s41, %s48
      %p262 = scmp.eq.s32.totalorder %s261, 0
      %s264 = sadd.s32 %s263, 1
      %s265 = scalar_select %p262, %s263, %s264
      %p268 = pneg %p262
      %p269 = scmp.eq.s32.totalorder %s33, 3
      %p270 = por %p268, %p269
      %p271 = scmp.ne.s32.totalorder %s263, %s266
      %p272 = scmp.eq.s32.totalorder %s33, 0
      %p273 = por %p271, %p272
      %p274 = scmp.ne.s32.totalorder %s263, %s266
      %p275 = scmp.eq.s32.totalorder %s38, 3
      %p276 = por %p274, %p275
      %p277 = scmp.ne.s32.totalorder %s266, %s267
      %p278 = scmp.eq.s32.totalorder %s38, 0
      %p279 = por %p277, %p278
      %p280 = scmp.ne.s32.totalorder %s266, %s267
      %p281 = scmp.eq.s32.totalorder %s39, 3
      %p282 = por %p280, %p281
      %p284 = scmp.ne.s32.totalorder %s267, %s283
      %p285 = scmp.eq.s32.totalorder %s39, 0
      %p286 = por %p284, %p285
      %s287 = ssub.s32 %s41, %s48
      %p288 = scmp.eq.s32.totalorder %s287, 0
      %s290 = sadd.s32 %s289, 1
      %s291 = scalar_select %p288, %s289, %s290
      %p294 = pneg %p288
      %p295 = scmp.eq.s32.totalorder %s33, 3
      %p296 = por %p294, %p295
      %p297 = scmp.ne.s32.totalorder %s289, %s292
      %p298 = scmp.eq.s32.totalorder %s33, 0
      %p299 = por %p297, %p298
      %p300 = scmp.ne.s32.totalorder %s289, %s292
      %p301 = scmp.eq.s32.totalorder %s38, 3
      %p302 = por %p300, %p301
      %p303 = scmp.ne.s32.totalorder %s292, %s293
      %p304 = scmp.eq.s32.totalorder %s38, 0
      %p305 = por %p303, %p304
      %p306 = scmp.ne.s32.totalorder %s292, %s293
      %p307 = scmp.eq.s32.totalorder %s39, 3
      %p308 = por %p306, %p307
      %p310 = scmp.ne.s32.totalorder %s293, %s309
      %p311 = scmp.eq.s32.totalorder %s39, 0
      %p312 = por %p310, %p311
      %s313 = ssub.s32 %s41, %s48
      %p314 = scmp.eq.s32.totalorder %s313, 0
      %s316 = sadd.s32 %s315, 1
      %s317 = scalar_select %p314, %s315, %s316
      %p320 = pneg %p314
      %p321 = scmp.eq.s32.totalorder %s33, 3
      %p322 = por %p320, %p321
      %p323 = scmp.ne.s32.totalorder %s315, %s318
      %p324 = scmp.eq.s32.totalorder %s33, 0
      %p325 = por %p323, %p324
      %p326 = scmp.ne.s32.totalorder %s315, %s318
      %p327 = scmp.eq.s32.totalorder %s38, 3
      %p328 = por %p326, %p327
      %p329 = scmp.ne.s32.totalorder %s318, %s319
      %p330 = scmp.eq.s32.totalorder %s38, 0
      %p331 = por %p329, %p330
      %p332 = scmp.ne.s32.totalorder %s318, %s319
      %p333 = scmp.eq.s32.totalorder %s39, 3
      %p334 = por %p332, %p333
      %p336 = scmp.ne.s32.totalorder %s319, %s335
      %p337 = scmp.eq.s32.totalorder %s39, 0
      %p338 = por %p336, %p337
      %s339 = ssub.s32 %s41, %s48
      %p340 = scmp.eq.s32.totalorder %s339, 0
      %s342 = sadd.s32 %s341, 1
      %s343 = scalar_select %p340, %s341, %s342
      %p346 = pneg %p340
      %p347 = scmp.eq.s32.totalorder %s33, 3
      %p348 = por %p346, %p347
      %p349 = scmp.ne.s32.totalorder %s341, %s344
      %p350 = scmp.eq.s32.totalorder %s33, 0
      %p351 = por %p349, %p350
      %p352 = scmp.ne.s32.totalorder %s341, %s344
      %p353 = scmp.eq.s32.totalorder %s38, 3
      %p354 = por %p352, %p353
      %p355 = scmp.ne.s32.totalorder %s344, %s345
      %p356 = scmp.eq.s32.totalorder %s38, 0
      %p357 = por %p355, %p356
      %p358 = scmp.ne.s32.totalorder %s344, %s345
      %p359 = scmp.eq.s32.totalorder %s39, 3
      %p360 = por %p358, %p359
      %p362 = scmp.ne.s32.totalorder %s345, %s361
      %p363 = scmp.eq.s32.totalorder %s39, 0
      %p364 = por %p362, %p363
      %s365 = ssub.s32 %s41, %s48
      %p366 = scmp.eq.s32.totalorder %s365, 0
      %s368 = sadd.s32 %s367, 1
      %s369 = scalar_select %p366, %s367, %s368
      %p372 = pneg %p366
      %p373 = scmp.eq.s32.totalorder %s33, 3
      %p374 = por %p372, %p373
      %p375 = scmp.ne.s32.totalorder %s367, %s370
      %p376 = scmp.eq.s32.totalorder %s33, 0
      %p377 = por %p375, %p376
      %p378 = scmp.ne.s32.totalorder %s367, %s370
      %p379 = scmp.eq.s32.totalorder %s38, 3
      %p380 = por %p378, %p379
      %p381 = scmp.ne.s32.totalorder %s370, %s371
      %p382 = scmp.eq.s32.totalorder %s38, 0
      %p383 = por %p381, %p382
      %p384 = scmp.ne.s32.totalorder %s370, %s371
      %p385 = scmp.eq.s32.totalorder %s39, 3
      %p386 = por %p384, %p385
      %p388 = scmp.ne.s32.totalorder %s371, %s387
      %p389 = scmp.eq.s32.totalorder %s39, 0
      %p390 = por %p388, %p389
      %s391 = ssub.s32 %s41, %s48
      %p392 = scmp.eq.s32.totalorder %s391, 0
      %s394 = sadd.s32 %s393, 1
      %s395 = scalar_select %p392, %s393, %s394
      %p398 = pneg %p392
      %p399 = scmp.eq.s32.totalorder %s33, 3
      %p400 = por %p398, %p399
      %p401 = scmp.ne.s32.totalorder %s393, %s396
      %p402 = scmp.eq.s32.totalorder %s33, 0
      %p403 = por %p401, %p402
      %p404 = scmp.ne.s32.totalorder %s393, %s396
      %p405 = scmp.eq.s32.totalorder %s38, 3
      %p406 = por %p404, %p405
      %p407 = scmp.ne.s32.totalorder %s396, %s397
      %p408 = scmp.eq.s32.totalorder %s38, 0
      %p409 = por %p407, %p408
      %p410 = scmp.ne.s32.totalorder %s396, %s397
      %p411 = scmp.eq.s32.totalorder %s39, 3
      %p412 = por %p410, %p411
      %p414 = scmp.ne.s32.totalorder %s397, %s413
      %p415 = scmp.eq.s32.totalorder %s39, 0
      %p416 = por %p414, %p415
      %s417 = ssub.s32 %s41, %s48
      %p418 = scmp.eq.s32.totalorder %s417, 0
      %s420 = sadd.s32 %s419, 1
      %s421 = scalar_select %p418, %s419, %s420
      %p424 = pneg %p418
      %p425 = scmp.eq.s32.totalorder %s33, 3
      %p426 = por %p424, %p425
      %p427 = scmp.ne.s32.totalorder %s419, %s422
      %p428 = scmp.eq.s32.totalorder %s33, 0
      %p429 = por %p427, %p428
      %p430 = scmp.ne.s32.totalorder %s419, %s422
      %p431 = scmp.eq.s32.totalorder %s38, 3
      %p432 = por %p430, %p431
      %p433 = scmp.ne.s32.totalorder %s422, %s423
      %p434 = scmp.eq.s32.totalorder %s38, 0
      %p435 = por %p433, %p434
      %p436 = scmp.ne.s32.totalorder %s422, %s423
      %p437 = scmp.eq.s32.totalorder %s39, 3
      %p438 = por %p436, %p437
      %p440 = scmp.ne.s32.totalorder %s423, %s439
      %p441 = scmp.eq.s32.totalorder %s39, 0
      %p442 = por %p440, %p441
      %s443 = ssub.s32 %s41, %s48
      %p444 = scmp.eq.s32.totalorder %s443, 0
      %s446 = sadd.s32 %s445, 1
      %s447 = scalar_select %p444, %s445, %s446
      %p450 = pneg %p444
      %p451 = scmp.eq.s32.totalorder %s33, 3
      %p452 = por %p450, %p451
      %p453 = scmp.ne.s32.totalorder %s445, %s448
      %p454 = scmp.eq.s32.totalorder %s33, 0
      %p455 = por %p453, %p454
      %p456 = scmp.ne.s32.totalorder %s445, %s448
      %p457 = scmp.eq.s32.totalorder %s38, 3
      %p458 = por %p456, %p457
      %p459 = scmp.ne.s32.totalorder %s448, %s449
      %p460 = scmp.eq.s32.totalorder %s38, 0
      %p461 = por %p459, %p460
      %p462 = scmp.ne.s32.totalorder %s448, %s449
      %p463 = scmp.eq.s32.totalorder %s39, 3
      %p464 = por %p462, %p463
      %p466 = scmp.ne.s32.totalorder %s449, %s465
      %p467 = scmp.eq.s32.totalorder %s39, 0
      %p468 = por %p466, %p467
      %s469 = ssub.s32 %s41, %s48
      %p470 = scmp.eq.s32.totalorder %s469, 0
      %s472 = sadd.s32 %s471, 1
      %s473 = scalar_select %p470, %s471, %s472
      %p476 = pneg %p470
      %p477 = scmp.eq.s32.totalorder %s33, 3
      %p478 = por %p476, %p477
      %p479 = scmp.ne.s32.totalorder %s471, %s474
      %p480 = scmp.eq.s32.totalorder %s33, 0
      %p481 = por %p479, %p480
      %p482 = scmp.ne.s32.totalorder %s471, %s474
      %p483 = scmp.eq.s32.totalorder %s38, 3
      %p484 = por %p482, %p483
      %p485 = scmp.ne.s32.totalorder %s474, %s475
      %p486 = scmp.eq.s32.totalorder %s38, 0
      %p487 = por %p485, %p486
      %p488 = scmp.ne.s32.totalorder %s474, %s475
      %p489 = scmp.eq.s32.totalorder %s39, 3
      %p490 = por %p488, %p489
      %p492 = scmp.ne.s32.totalorder %s475, %s491
      %p493 = scmp.eq.s32.totalorder %s39, 0
      %p494 = por %p492, %p493
      %s495 = ssub.s32 %s41, %s48
      %p496 = scmp.eq.s32.totalorder %s495, 0
      %s498 = sadd.s32 %s497, 1
      %s499 = scalar_select %p496, %s497, %s498
      %p502 = pneg %p496
      %p503 = scmp.eq.s32.totalorder %s33, 3
      %p504 = por %p502, %p503
      %p505 = scmp.ne.s32.totalorder %s497, %s500
      %p506 = scmp.eq.s32.totalorder %s33, 0
      %p507 = por %p505, %p506
      %p508 = scmp.ne.s32.totalorder %s497, %s500
      %p509 = scmp.eq.s32.totalorder %s38, 3
      %p510 = por %p508, %p509
      %p511 = scmp.ne.s32.totalorder %s500, %s501
      %p512 = scmp.eq.s32.totalorder %s38, 0
      %p513 = por %p511, %p512
      %p514 = scmp.ne.s32.totalorder %s500, %s501
      %p515 = scmp.eq.s32.totalorder %s39, 3
      %p516 = por %p514, %p515
      %p518 = scmp.ne.s32.totalorder %s501, %s517
      %p519 = scmp.eq.s32.totalorder %s39, 0
      %p520 = por %p518, %p519
      %s521 = ssub.s32 %s40, %s52
      %p522 = scmp.eq.s32.totalorder %s521, 0
      %s524 = sadd.s32 %s523, 1
      %s525 = scalar_select %p522, %s523, %s524
      %p528 = pneg %p522
      %p529 = scmp.eq.s32.totalorder %s33, 3
      %p530 = por %p528, %p529
      %p531 = scmp.ne.s32.totalorder %s523, %s526
      %p532 = scmp.eq.s32.totalorder %s33, 0
      %p533 = por %p531, %p532
      %p534 = scmp.ne.s32.totalorder %s523, %s526
      %p535 = scmp.eq.s32.totalorder %s38, 3
      %p536 = por %p534, %p535
      %p537 = scmp.ne.s32.totalorder %s526, %s527
      %p538 = scmp.eq.s32.totalorder %s38, 0
      %p539 = por %p537, %p538
      %p540 = scmp.ne.s32.totalorder %s526, %s527
      %p541 = scmp.eq.s32.totalorder %s39, 3
      %p542 = por %p540, %p541
      %p544 = scmp.ne.s32.totalorder %s527, %s543
      %p545 = scmp.eq.s32.totalorder %s39, 0
      %p546 = por %p544, %p545
      %p547 = scmp.le.s32.totalorder 1, %s33
      %p548 = scmp.lt.s32.totalorder %s33, 5
      %p549 = pnand %p547, %p548
      %p550 = pneg %p549
      // Predicated region
      $region9: #{tpu_custom_call.1} parent=5 // pred_check
        _
      $region10: #{tpu_custom_call.1} parent=5 // pred_check_branch
        %552 = sbr.rel (%p549) target = $region12
      $region11: #{tpu_custom_call.1} parent=5 // pred_region
        %s553 = ssub.s32 %s33, 1
      $region12: #{tpu_custom_call.1} parent=5 // pred_fallthru
        _
      %p554 = scmp.lt.s32.totalorder %s33, 4
      // Predicated region
      $region13: #{tpu_custom_call.1} parent=5 // pred_check
        %p555 = pneg %p554
      $region14: #{tpu_custom_call.1} parent=5 // pred_check_branch
        %557 = sbr.rel (%p555) target = $region16
      $region15: #{tpu_custom_call.1} parent=5 // pred_region
        // Predicated region
        $region17: #{tpu_custom_call.1} parent=15 // pred_check
          %p558 = pneg %p65
        $region18: #{tpu_custom_call.1} parent=15 // pred_check_branch
          %560 = sbr.rel (%p558) target = $region20
        $region19: #{tpu_custom_call.1} parent=15 // pred_region
          %s561 = sand.u32 %s55, 1
          %s562 = scalar_lea.sflag [#allocation3], %s561
          %s563 = sand.u32 %s55, 1
          %s564 = scalar_lea.vmem [#allocation2], %s563
          %s566 = ssub.s32 16, 16
          %567 = vsyncadd %s562, %s566
          %s568 = smul.addr %s40, 16
          %s569 = scalar_lea.hbm %s0, %s568
          %s571 = sshll.u32 %s564, 4
          %s572 = int_to_ptr.vmem [resolvable:$true] %s571
          %574 = dma.hbm_to_vmem [thread:$0]  %s569, 16, %s572, %s562
        $region20: #{tpu_custom_call.1} parent=15 // pred_fallthru
          _
        // Predicated region
        $region21: #{tpu_custom_call.1} parent=15 // pred_check
          %p575 = pneg %p91
        $region22: #{tpu_custom_call.1} parent=15 // pred_check_branch
          %577 = sbr.rel (%p575) target = $region24
        $region23: #{tpu_custom_call.1} parent=15 // pred_region
          %s578 = sand.u32 %s81, 1
          %s579 = scalar_lea.sflag [#allocation6], %s578
          %s580 = sand.u32 %s81, 1
          %s581 = smul.addr %s580, 8
          %s582 = scalar_lea.vmem [#allocation5], %s581
          %s584 = ssub.s32 128, 128
          %585 = vsyncadd %s579, %s584
          %s586 = smul.addr %s40, 128
          %s587 = scalar_lea.hbm %s1, %s586
          %s589 = sshll.u32 %s582, 4
          %s590 = int_to_ptr.vmem [resolvable:$true] %s589
          %592 = dma.hbm_to_vmem [thread:$0]  %s587, 128, %s590, %s579
        $region24: #{tpu_custom_call.1} parent=15 // pred_fallthru
          _
        // Predicated region
        $region25: #{tpu_custom_call.1} parent=15 // pred_check
          %p593 = pneg %p117
        $region26: #{tpu_custom_call.1} parent=15 // pred_check_branch
          %595 = sbr.rel (%p593) target = $region28
        $region27: #{tpu_custom_call.1} parent=15 // pred_region
          %p596 = scmp.lt.s32.totalorder %s41, 1
          %s597 = scalar_select %p596, %s41, 1
          %s598 = smul.addr %s597, 4
          %s599 = smul.addr %s598, 4
          %s600 = scalar_lea.vmem %s2, %s599
        $region28: #{tpu_custom_call.1} parent=15 // pred_fallthru
          _
        // Predicated region
        $region29: #{tpu_custom_call.1} parent=15 // pred_check
          %p601 = pneg %p143
        $region30: #{tpu_custom_call.1} parent=15 // pred_check_branch
          %603 = sbr.rel (%p601) target = $region32
        $region31: #{tpu_custom_call.1} parent=15 // pred_region
          %p604 = scmp.lt.s32.totalorder %s41, 1
          %s605 = scalar_select %p604, %s41, 1
          %s606 = scalar_lea.vmem %s3, %s605
        $region32: #{tpu_custom_call.1} parent=15 // pred_fallthru
          _
        // Predicated region
        $region33: #{tpu_custom_call.1} parent=15 // pred_check
          %p607 = pneg %p169
        $region34: #{tpu_custom_call.1} parent=15 // pred_check_branch
          %609 = sbr.rel (%p607) target = $region36
        $region35: #{tpu_custom_call.1} parent=15 // pred_region
          %p610 = scmp.lt.s32.totalorder %s41, 1
          %s611 = scalar_select %p610, %s41, 1
          %s612 = smul.addr %s611, 4
          %s613 = smul.addr %s612, 4
          %s614 = scalar_lea.vmem %s4, %s613
        $region36: #{tpu_custom_call.1} parent=15 // pred_fallthru
          _
        // Predicated region
        $region37: #{tpu_custom_call.1} parent=15 // pred_check
          %p615 = pneg %p195
        $region38: #{tpu_custom_call.1} parent=15 // pred_check_branch
          %617 = sbr.rel (%p615) target = $region40
        $region39: #{tpu_custom_call.1} parent=15 // pred_region
          %p618 = scmp.lt.s32.totalorder %s41, 1
          %s619 = scalar_select %p618, %s41, 1
          %s620 = scalar_lea.vmem %s5, %s619
        $region40: #{tpu_custom_call.1} parent=15 // pred_fallthru
          _
        // Predicated region
        $region41: #{tpu_custom_call.1} parent=15 // pred_check
          %p621 = pneg %p221
        $region42: #{tpu_custom_call.1} parent=15 // pred_check_branch
          %623 = sbr.rel (%p621) target = $region44
        $region43: #{tpu_custom_call.1} parent=15 // pred_region
          %p624 = scmp.lt.s32.totalorder %s41, 1
          %s625 = scalar_select %p624, %s41, 1
          %s626 = smul.addr %s625, 4
          %s627 = smul.addr %s626, 4
          %s628 = scalar_lea.vmem %s6, %s627
        $region44: #{tpu_custom_call.1} parent=15 // pred_fallthru
          _
        // Predicated region
        $region45: #{tpu_custom_call.1} parent=15 // pred_check
          %p629 = pneg %p247
        $region46: #{tpu_custom_call.1} parent=15 // pred_check_branch
          %631 = sbr.rel (%p629) target = $region48
        $region47: #{tpu_custom_call.1} parent=15 // pred_region
          %p632 = scmp.lt.s32.totalorder %s41, 1
          %s633 = scalar_select %p632, %s41, 1
          %s634 = scalar_lea.vmem %s7, %s633
        $region48: #{tpu_custom_call.1} parent=15 // pred_fallthru
          _
        // Predicated region
        $region49: #{tpu_custom_call.1} parent=15 // pred_check
          %p635 = pneg %p273
        $region50: #{tpu_custom_call.1} parent=15 // pred_check_branch
          %637 = sbr.rel (%p635) target = $region52
        $region51: #{tpu_custom_call.1} parent=15 // pred_region
          %p638 = scmp.lt.s32.totalorder %s41, 1
          %s639 = scalar_select %p638, %s41, 1
          %s640 = smul.addr %s639, 4
          %s641 = smul.addr %s640, 4
          %s642 = scalar_lea.vmem %s8, %s641
        $region52: #{tpu_custom_call.1} parent=15 // pred_fallthru
          _
        // Predicated region
        $region53: #{tpu_custom_call.1} parent=15 // pred_check
          %p643 = pneg %p299
        $region54: #{tpu_custom_call.1} parent=15 // pred_check_branch
          %645 = sbr.rel (%p643) target = $region56
        $region55: #{tpu_custom_call.1} parent=15 // pred_region
          %p646 = scmp.lt.s32.totalorder %s41, 1
          %s647 = scalar_select %p646, %s41, 1
          %s648 = scalar_lea.vmem %s9, %s647
        $region56: #{tpu_custom_call.1} parent=15 // pred_fallthru
          _
        // Predicated region
        $region57: #{tpu_custom_call.1} parent=15 // pred_check
          %p649 = pneg %p325
        $region58: #{tpu_custom_call.1} parent=15 // pred_check_branch
          %651 = sbr.rel (%p649) target = $region60
        $region59: #{tpu_custom_call.1} parent=15 // pred_region
          %p652 = scmp.lt.s32.totalorder %s41, 1
          %s653 = scalar_select %p652, %s41, 1
          %s654 = scalar_lea.vmem %s10, %s653
        $region60: #{tpu_custom_call.1} parent=15 // pred_fallthru
          _
        // Predicated region
        $region61: #{tpu_custom_call.1} parent=15 // pred_check
          %p655 = pneg %p351
        $region62: #{tpu_custom_call.1} parent=15 // pred_check_branch
          %657 = sbr.rel (%p655) target = $region64
        $region63: #{tpu_custom_call.1} parent=15 // pred_region
          %p658 = scmp.lt.s32.totalorder %s41, 1
          %s659 = scalar_select %p658, %s41, 1
          %s660 = scalar_lea.vmem %s11, %s659
        $region64: #{tpu_custom_call.1} parent=15 // pred_fallthru
          _
        // Predicated region
        $region65: #{tpu_custom_call.1} parent=15 // pred_check
          %p661 = pneg %p377
        $region66: #{tpu_custom_call.1} parent=15 // pred_check_branch
          %663 = sbr.rel (%p661) target = $region68
        $region67: #{tpu_custom_call.1} parent=15 // pred_region
          %p664 = scmp.lt.s32.totalorder %s41, 1
          %s665 = scalar_select %p664, %s41, 1
          %s666 = smul.addr %s665, 4
          %s667 = smul.addr %s666, 4
          %s668 = scalar_lea.vmem %s12, %s667
        $region68: #{tpu_custom_call.1} parent=15 // pred_fallthru
          _
        // Predicated region
        $region69: #{tpu_custom_call.1} parent=15 // pred_check
          %p669 = pneg %p403
        $region70: #{tpu_custom_call.1} parent=15 // pred_check_branch
          %671 = sbr.rel (%p669) target = $region72
        $region71: #{tpu_custom_call.1} parent=15 // pred_region
          %p672 = scmp.lt.s32.totalorder %s41, 1
          %s673 = scalar_select %p672, %s41, 1
          %s674 = scalar_lea.vmem %s13, %s673
        $region72: #{tpu_custom_call.1} parent=15 // pred_fallthru
          _
        // Predicated region
        $region73: #{tpu_custom_call.1} parent=15 // pred_check
          %p675 = pneg %p429
        $region74: #{tpu_custom_call.1} parent=15 // pred_check_branch
          %677 = sbr.rel (%p675) target = $region76
        $region75: #{tpu_custom_call.1} parent=15 // pred_region
          %p678 = scmp.lt.s32.totalorder %s41, 1
          %s679 = scalar_select %p678, %s41, 1
          %s680 = smul.addr %s679, 16
          %s681 = smul.addr %s680, 4
          %s682 = scalar_lea.vmem %s14, %s681
        $region76: #{tpu_custom_call.1} parent=15 // pred_fallthru
          _
        // Predicated region
        $region77: #{tpu_custom_call.1} parent=15 // pred_check
          %p683 = pneg %p455
        $region78: #{tpu_custom_call.1} parent=15 // pred_check_branch
          %685 = sbr.rel (%p683) target = $region80
        $region79: #{tpu_custom_call.1} parent=15 // pred_region
          %p686 = scmp.lt.s32.totalorder %s41, 1
          %s687 = scalar_select %p686, %s41, 1
          %s688 = scalar_lea.vmem %s15, %s687
        $region80: #{tpu_custom_call.1} parent=15 // pred_fallthru
          _
        // Predicated region
        $region81: #{tpu_custom_call.1} parent=15 // pred_check
          %p689 = pneg %p481
        $region82: #{tpu_custom_call.1} parent=15 // pred_check_branch
          %691 = sbr.rel (%p689) target = $region84
        $region83: #{tpu_custom_call.1} parent=15 // pred_region
          %p692 = scmp.lt.s32.totalorder %s41, 1
          %s693 = scalar_select %p692, %s41, 1
          %s694 = scalar_lea.vmem %s16, %s693
        $region84: #{tpu_custom_call.1} parent=15 // pred_fallthru
          _
        // Predicated region
        $region85: #{tpu_custom_call.1} parent=15 // pred_check
          %p695 = pneg %p507
        $region86: #{tpu_custom_call.1} parent=15 // pred_check_branch
          %697 = sbr.rel (%p695) target = $region88
        $region87: #{tpu_custom_call.1} parent=15 // pred_region
          %p698 = scmp.lt.s32.totalorder %s41, 1
          %s699 = scalar_select %p698, %s41, 1
          %s700 = scalar_lea.vmem %s17, %s699
        $region88: #{tpu_custom_call.1} parent=15 // pred_fallthru
          _
      $region16: #{tpu_custom_call.1} parent=5 // pred_fallthru
        _
      %p701 = scmp.le.s32.totalorder 1, %s33
      %p702 = scmp.lt.s32.totalorder %s33, 5
      %p703 = pnand %p701, %p702
      %p704 = pneg %p703
      // Predicated region
      $region89: #{tpu_custom_call.1} parent=5 // pred_check
        _
      $region90: #{tpu_custom_call.1} parent=5 // pred_check_branch
        %706 = sbr.rel (%p703) target = $region92
      $region91: #{tpu_custom_call.1} parent=5 // pred_region
        %s707 = ssub.s32 %s33, 1
        %s708 = sand.u32 %s58, 1
        %s709 = scalar_lea.sflag [#allocation3], %s708
        %s710 = sand.u32 %s58, 1
        %s711 = scalar_lea.vmem [#allocation2], %s710
        // Predicated region
        $region93: #{tpu_custom_call.1} parent=91 // pred_check
          %p712 = pneg %p71
        $region94: #{tpu_custom_call.1} parent=91 // pred_check_branch
          %714 = sbr.rel (%p712) target = $region96
        $region95: #{tpu_custom_call.1} parent=91 // pred_region
          %715 = dma.done %s709, 16
        $region96: #{tpu_custom_call.1} parent=91 // pred_fallthru
          _
        %s716 = sand.u32 %s84, 1
        %s717 = scalar_lea.sflag [#allocation6], %s716
        %s718 = sand.u32 %s84, 1
        %s719 = smul.addr %s718, 8
        %s720 = scalar_lea.vmem [#allocation5], %s719
        // Predicated region
        $region97: #{tpu_custom_call.1} parent=91 // pred_check
          %p721 = pneg %p97
        $region98: #{tpu_custom_call.1} parent=91 // pred_check_branch
          %723 = sbr.rel (%p721) target = $region100
        $region99: #{tpu_custom_call.1} parent=91 // pred_region
          %724 = dma.done %s717, 128
        $region100: #{tpu_custom_call.1} parent=91 // pred_fallthru
          _
        %s725 = sand.u32 %s58, 1
        %s726 = scalar_lea.sflag [#allocation3], %s725
        %s727 = sand.u32 %s58, 1
        %s728 = scalar_lea.vmem [#allocation2], %s727
        %p729 = pneg %p71
        %p730 = pneg %p68
        %s731 = sand.u32 %s84, 1
        %s732 = scalar_lea.sflag [#allocation6], %s731
        %s733 = sand.u32 %s84, 1
        %s734 = smul.addr %s733, 8
        %s735 = scalar_lea.vmem [#allocation5], %s734
        %p736 = pneg %p97
        %p737 = pneg %p94
        %p738 = scmp.lt.s32.totalorder %s43, 1
        %s739 = scalar_select %p738, %s43, 1
        %s740 = smul.addr %s739, 4
        %s741 = smul.addr %s740, 4
        %s742 = scalar_lea.vmem %s2, %s741
        %p743 = pneg %p123
        %p744 = pneg %p120
        %p745 = scmp.lt.s32.totalorder %s43, 1
        %s746 = scalar_select %p745, %s43, 1
        %s747 = scalar_lea.vmem %s3, %s746
        %p748 = pneg %p149
        %p749 = pneg %p146
        %p750 = scmp.lt.s32.totalorder %s43, 1
        %s751 = scalar_select %p750, %s43, 1
        %s752 = smul.addr %s751, 4
        %s753 = smul.addr %s752, 4
        %s754 = scalar_lea.vmem %s4, %s753
        %p755 = pneg %p175
        %p756 = pneg %p172
        %p757 = scmp.lt.s32.totalorder %s43, 1
        %s758 = scalar_select %p757, %s43, 1
        %s759 = scalar_lea.vmem %s5, %s758
        %p760 = pneg %p201
        %p761 = pneg %p198
        %p762 = scmp.lt.s32.totalorder %s43, 1
        %s763 = scalar_select %p762, %s43, 1
        %s764 = smul.addr %s763, 4
        %s765 = smul.addr %s764, 4
        %s766 = scalar_lea.vmem %s6, %s765
        %p767 = pneg %p227
        %p768 = pneg %p224
        %p769 = scmp.lt.s32.totalorder %s43, 1
        %s770 = scalar_select %p769, %s43, 1
        %s771 = scalar_lea.vmem %s7, %s770
        %p772 = pneg %p253
        %p773 = pneg %p250
        %p774 = scmp.lt.s32.totalorder %s43, 1
        %s775 = scalar_select %p774, %s43, 1
        %s776 = smul.addr %s775, 4
        %s777 = smul.addr %s776, 4
        %s778 = scalar_lea.vmem %s8, %s777
        %p779 = pneg %p279
        %p780 = pneg %p276
        %p781 = scmp.lt.s32.totalorder %s43, 1
        %s782 = scalar_select %p781, %s43, 1
        %s783 = scalar_lea.vmem %s9, %s782
        %p784 = pneg %p305
        %p785 = pneg %p302
        %p786 = scmp.lt.s32.totalorder %s43, 1
        %s787 = scalar_select %p786, %s43, 1
        %s788 = scalar_lea.vmem %s10, %s787
        %p789 = pneg %p331
        %p790 = pneg %p328
        %p791 = scmp.lt.s32.totalorder %s43, 1
        %s792 = scalar_select %p791, %s43, 1
        %s793 = scalar_lea.vmem %s11, %s792
        %p794 = pneg %p357
        %p795 = pneg %p354
        %p796 = scmp.lt.s32.totalorder %s43, 1
        %s797 = scalar_select %p796, %s43, 1
        %s798 = smul.addr %s797, 4
        %s799 = smul.addr %s798, 4
        %s800 = scalar_lea.vmem %s12, %s799
        %p801 = pneg %p383
        %p802 = pneg %p380
        %p803 = scmp.lt.s32.totalorder %s43, 1
        %s804 = scalar_select %p803, %s43, 1
        %s805 = scalar_lea.vmem %s13, %s804
        %p806 = pneg %p409
        %p807 = pneg %p406
        %p808 = scmp.lt.s32.totalorder %s43, 1
        %s809 = scalar_select %p808, %s43, 1
        %s810 = smul.addr %s809, 16
        %s811 = smul.addr %s810, 4
        %s812 = scalar_lea.vmem %s14, %s811
        %p813 = pneg %p435
        %p814 = pneg %p432
        %p815 = scmp.lt.s32.totalorder %s43, 1
        %s816 = scalar_select %p815, %s43, 1
        %s817 = scalar_lea.vmem %s15, %s816
        %p818 = pneg %p461
        %p819 = pneg %p458
        %p820 = scmp.lt.s32.totalorder %s43, 1
        %s821 = scalar_select %p820, %s43, 1
        %s822 = scalar_lea.vmem %s16, %s821
        %p823 = pneg %p487
        %p824 = pneg %p484
        %p825 = scmp.lt.s32.totalorder %s43, 1
        %s826 = scalar_select %p825, %s43, 1
        %s827 = scalar_lea.vmem %s17, %s826
        %p828 = pneg %p513
        %p829 = pneg %p510
        %p830 = pneg %p539
        %p831 = pneg %p536
        %s832 = sand.u32 %s526, 1
        %s833 = scalar_lea.sflag [#allocation4], %s832
        %s834 = sand.u32 %s526, 1
        %s835 = smul.addr %s834, 8
        %s836 = scalar_lea.vmem [#allocation7], %s835
        %p837 = scmp.lt.s32.totalorder %s43, 1
        %s838 = scalar_select %p837, %s43, 1
        %s839 = smul.addr %s838, 4
        %s840 = smul.addr %s839, 4
        %s841 = scalar_lea.vmem %s2, %s840
        %p842 = scmp.lt.s32.totalorder %s43, 1
        %s843 = scalar_select %p842, %s43, 1
        %s844 = scalar_lea.vmem %s3, %s843
        %p845 = scmp.lt.s32.totalorder %s43, 1
        %s846 = scalar_select %p845, %s43, 1
        %s847 = smul.addr %s846, 4
        %s848 = smul.addr %s847, 4
        %s849 = scalar_lea.vmem %s4, %s848
        %p850 = scmp.lt.s32.totalorder %s43, 1
        %s851 = scalar_select %p850, %s43, 1
        %s852 = scalar_lea.vmem %s5, %s851
        %p853 = scmp.lt.s32.totalorder %s43, 1
        %s854 = scalar_select %p853, %s43, 1
        %s855 = smul.addr %s854, 4
        %s856 = smul.addr %s855, 4
        %s857 = scalar_lea.vmem %s6, %s856
        %p858 = scmp.lt.s32.totalorder %s43, 1
        %s859 = scalar_select %p858, %s43, 1
        %s860 = scalar_lea.vmem %s7, %s859
        %p861 = scmp.lt.s32.totalorder %s43, 1
        %s862 = scalar_select %p861, %s43, 1
        %s863 = smul.addr %s862, 4
        %s864 = smul.addr %s863, 4
        %s865 = scalar_lea.vmem %s8, %s864
        %p866 = scmp.lt.s32.totalorder %s43, 1
        %s867 = scalar_select %p866, %s43, 1
        %s868 = scalar_lea.vmem %s9, %s867
        %p869 = scmp.lt.s32.totalorder %s43, 1
        %s870 = scalar_select %p869, %s43, 1
        %s871 = scalar_lea.vmem %s10, %s870
        %p872 = scmp.lt.s32.totalorder %s43, 1
        %s873 = scalar_select %p872, %s43, 1
        %s874 = scalar_lea.vmem %s11, %s873
        %p875 = scmp.lt.s32.totalorder %s43, 1
        %s876 = scalar_select %p875, %s43, 1
        %s877 = smul.addr %s876, 4
        %s878 = smul.addr %s877, 4
        %s879 = scalar_lea.vmem %s12, %s878
        %p880 = scmp.lt.s32.totalorder %s43, 1
        %s881 = scalar_select %p880, %s43, 1
        %s882 = scalar_lea.vmem %s13, %s881
        %p883 = scmp.lt.s32.totalorder %s43, 1
        %s884 = scalar_select %p883, %s43, 1
        %s885 = smul.addr %s884, 16
        %s886 = smul.addr %s885, 4
        %s887 = scalar_lea.vmem %s14, %s886
        %p888 = scmp.lt.s32.totalorder %s43, 1
        %s889 = scalar_select %p888, %s43, 1
        %s890 = scalar_lea.vmem %s15, %s889
        %p891 = scmp.lt.s32.totalorder %s43, 1
        %s892 = scalar_select %p891, %s43, 1
        %s893 = scalar_lea.vmem %s16, %s892
        %p894 = scmp.lt.s32.totalorder %s43, 1
        %s895 = scalar_select %p894, %s43, 1
        %s896 = scalar_lea.vmem %s17, %s895
        %p898 = scmp.eq.s32.totalorder %s43, 0
        // Predicated region
        $region101: #{tpu_custom_call.1} parent=91 // pred_check
          %p899 = pneg %p898
        $region102: #{tpu_custom_call.1} parent=91 // pred_check_branch
          %901 = sbr.rel (%p899) target = $region104
        $region103: #{tpu_custom_call.1} parent=91 // pred_region
          %v902 = vld [vmem:[%s720] sm:$0xff]
          %vm903 = vcmask 261120
          %904 = vst.msk [vmem:[%s836] sm:$0xff] %vm903, %v902
        $region104: #{tpu_custom_call.1} parent=91 // pred_fallthru
          _
        %v905 = vld [vmem:[%s836] sm:$0xff]
        %v906 = vpack.c.bf16 %v905, %v905
        %v907 = vld [vmem:[%s711] sm:$0x1]
        %vm908 = vcmp.gt.f32.partialorder %v907, 0.5
        %v909 = vsel %vm908, -1e+09, 0.0
        %v910 = vld [vmem:[%s841] sm:$0xf]
        %v911 = vld [vmem:[%s841 + $0x4] sm:$0xf]
        %v912 = vld [vmem:[%s841 + $0x8] sm:$0xf]
        %v913 = vld [vmem:[%s841 + $0xc] sm:$0xf]
        %v914 = vld [vmem:[%s844] sm:$0x1]
        %v916 = vlaneseq
        %v917 = vshrl.u32 %v916, 7
        %v918 = vsub.s32 0, %v917
        %v919 = vrot.slane %v914, %v918
        %v925 = vunpack.c.l.b16 %v910
        %v926 = vunpack.c.l.b16 %v911
        %v927 = vunpack.c.l.b16 %v912
        %v928 = vunpack.c.l.b16 %v913
        %v929 = vpack.c.b16 %v926, %v925
        %v930 = vpack.c.b16 %v928, %v927
        %vm933 = vcmask 261120
        %v935 = vsel %vm933, %v906, 0
        %937 = vmatprep.subr.bf16.mxu0 0
        %938 = vmatpush1.bf16.msra.mxu0 0
        %939 = vmatprep.subr.bf16.mxu0 0
        %940 = vmatpush1.bf16.msra.mxu0 0
        %941 = vmatprep.subr.bf16.mxu0 0
        %942 = vmatpush1.bf16.msra.mxu0 0
        %943 = vmatprep.subr.bf16.mxu0 0
        %944 = vmatpush1.bf16.msra.mxu0 0
        %945 = vmatprep.subr.bf16.mxu0 0
        %946 = vmatpush1.bf16.msra.mxu0 0
        %947 = vmatprep.subr.bf16.mxu0 0
        %948 = vmatpush1.bf16.msra.mxu0 0
        %949 = vmatprep.subr.bf16.mxu0 0
        %950 = vmatpush1.bf16.msra.mxu0 %v930
        %951 = vmatprep.subr.bf16.mxu0 0
        %952 = vmatpush1.bf16.msra.mxu0 %v929
        %953 = vmatprep.subr.bf16.mxu0 0
        %954 = vmatpush2.bf16.msra.mxu0 0
        %955 = vmatprep.subr.bf16.mxu0 0
        %956 = vmatpush2.bf16.msra.mxu0 0
        %957 = vmatprep.subr.bf16.mxu0 0
        %958 = vmatpush2.bf16.msra.mxu0 0
        %959 = vmatprep.subr.bf16.mxu0 0
        %960 = vmatpush2.bf16.msra.mxu0 0
        %961 = vmatprep.subr.bf16.mxu0 0
        %962 = vmatpush2.bf16.msra.mxu0 0
        %963 = vmatprep.subr.bf16.mxu0 0
        %964 = vmatpush2.bf16.msra.mxu0 0
        %965 = vmatprep.subr.bf16.mxu0 0
        %966 = vmatpush2.bf16.msra.mxu0 0
        %967 = vmatprep.subr.bf16.mxu0 0
        %968 = vmatpush2.bf16.msra.mxu0 0
        %969 = vmatprep.mubr.bf16.mxu0 0
        %970 = vmatmul.mubr.bf16.gmra.mxu0 %v935
        %v971 = vpop.f32.mrf.mxu0
        %v972 = vadd.f32 %v919, %v971
        %v973 = vpop.f32.mrf.mxu0
        %v974 = vpop.f32.mrf.mxu0
        %v975 = vpop.f32.mrf.mxu0
        %976 = vdwg.mxu0
        %v977 = vld [vmem:[%s849] sm:$0xf]
        %v978 = vld [vmem:[%s849 + $0x4] sm:$0xf]
        %v979 = vld [vmem:[%s849 + $0x8] sm:$0xf]
        %v980 = vld [vmem:[%s849 + $0xc] sm:$0xf]
        %v981 = vld [vmem:[%s852] sm:$0x1]
        %v983 = vlaneseq
        %v984 = vshrl.u32 %v983, 7
        %v985 = vsub.s32 0, %v984
        %v986 = vrot.slane %v981, %v985
        %v992 = vunpack.c.l.b16 %v977
        %v993 = vunpack.c.l.b16 %v978
        %v994 = vunpack.c.l.b16 %v979
        %v995 = vunpack.c.l.b16 %v980
        %v996 = vpack.c.b16 %v993, %v992
        %v997 = vpack.c.b16 %v995, %v994
        %1000 = vmatprep.subr.bf16.mxu0 0
        %1001 = vmatpush1.bf16.msra.mxu0 0
        %1002 = vmatprep.subr.bf16.mxu0 0
        %1003 = vmatpush1.bf16.msra.mxu0 0
        %1004 = vmatprep.subr.bf16.mxu0 0
        %1005 = vmatpush1.bf16.msra.mxu0 0
        %1006 = vmatprep.subr.bf16.mxu0 0
        %1007 = vmatpush1.bf16.msra.mxu0 0
        %1008 = vmatprep.subr.bf16.mxu0 0
        %1009 = vmatpush1.bf16.msra.mxu0 0
        %1010 = vmatprep.subr.bf16.mxu0 0
        %1011 = vmatpush1.bf16.msra.mxu0 0
        %1012 = vmatprep.subr.bf16.mxu0 0
        %1013 = vmatpush1.bf16.msra.mxu0 %v997
        %1014 = vmatprep.subr.bf16.mxu0 0
        %1015 = vmatpush1.bf16.msra.mxu0 %v996
        %1016 = vmatprep.subr.bf16.mxu0 0
        %1017 = vmatpush2.bf16.msra.mxu0 0
        %1018 = vmatprep.subr.bf16.mxu0 0
        %1019 = vmatpush2.bf16.msra.mxu0 0
        %1020 = vmatprep.subr.bf16.mxu0 0
        %1021 = vmatpush2.bf16.msra.mxu0 0
        %1022 = vmatprep.subr.bf16.mxu0 0
        %1023 = vmatpush2.bf16.msra.mxu0 0
        %1024 = vmatprep.subr.bf16.mxu0 0
        %1025 = vmatpush2.bf16.msra.mxu0 0
        %1026 = vmatprep.subr.bf16.mxu0 0
        %1027 = vmatpush2.bf16.msra.mxu0 0
        %1028 = vmatprep.subr.bf16.mxu0 0
        %1029 = vmatpush2.bf16.msra.mxu0 0
        %1030 = vmatprep.subr.bf16.mxu0 0
        %1031 = vmatpush2.bf16.msra.mxu0 0
        %1032 = vmatprep.mubr.bf16.mxu0 0
        %1033 = vmatmul.mubr.bf16.gmra.mxu0 %v935
        %v1034 = vpop.f32.mrf.mxu0
        %v1035 = vadd.f32 %v986, %v1034
        %v1036 = vpop.f32.mrf.mxu0
        %v1037 = vpop.f32.mrf.mxu0
        %v1038 = vpop.f32.mrf.mxu0
        %1039 = vdwg.mxu0
        %v1040 = vld [vmem:[%s857] sm:$0xf]
        %v1041 = vld [vmem:[%s857 + $0x4] sm:$0xf]
        %v1042 = vld [vmem:[%s857 + $0x8] sm:$0xf]
        %v1043 = vld [vmem:[%s857 + $0xc] sm:$0xf]
        %v1044 = vld [vmem:[%s860] sm:$0x1]
        %v1046 = vlaneseq
        %v1047 = vshrl.u32 %v1046, 7
        %v1048 = vsub.s32 0, %v1047
        %v1049 = vrot.slane %v1044, %v1048
        %v1055 = vunpack.c.l.b16 %v1040
        %v1056 = vunpack.c.l.b16 %v1041
        %v1057 = vunpack.c.l.b16 %v1042
        %v1058 = vunpack.c.l.b16 %v1043
        %v1059 = vpack.c.b16 %v1056, %v1055
        %v1060 = vpack.c.b16 %v1058, %v1057
        %1063 = vmatprep.subr.bf16.mxu0 0
        %1064 = vmatpush1.bf16.msra.mxu0 0
        %1065 = vmatprep.subr.bf16.mxu0 0
        %1066 = vmatpush1.bf16.msra.mxu0 0
        %1067 = vmatprep.subr.bf16.mxu0 0
        %1068 = vmatpush1.bf16.msra.mxu0 0
        %1069 = vmatprep.subr.bf16.mxu0 0
        %1070 = vmatpush1.bf16.msra.mxu0 0
        %1071 = vmatprep.subr.bf16.mxu0 0
        %1072 = vmatpush1.bf16.msra.mxu0 0
        %1073 = vmatprep.subr.bf16.mxu0 0
        %1074 = vmatpush1.bf16.msra.mxu0 0
        %1075 = vmatprep.subr.bf16.mxu0 0
        %1076 = vmatpush1.bf16.msra.mxu0 %v1060
        %1077 = vmatprep.subr.bf16.mxu0 0
        %1078 = vmatpush1.bf16.msra.mxu0 %v1059
        %1079 = vmatprep.subr.bf16.mxu0 0
        %1080 = vmatpush2.bf16.msra.mxu0 0
        %1081 = vmatprep.subr.bf16.mxu0 0
        %1082 = vmatpush2.bf16.msra.mxu0 0
        %1083 = vmatprep.subr.bf16.mxu0 0
        %1084 = vmatpush2.bf16.msra.mxu0 0
        %1085 = vmatprep.subr.bf16.mxu0 0
        %1086 = vmatpush2.bf16.msra.mxu0 0
        %1087 = vmatprep.subr.bf16.mxu0 0
        %1088 = vmatpush2.bf16.msra.mxu0 0
        %1089 = vmatprep.subr.bf16.mxu0 0
        %1090 = vmatpush2.bf16.msra.mxu0 0
        %1091 = vmatprep.subr.bf16.mxu0 0
        %1092 = vmatpush2.bf16.msra.mxu0 0
        %1093 = vmatprep.subr.bf16.mxu0 0
        %1094 = vmatpush2.bf16.msra.mxu0 0
        %1095 = vmatprep.mubr.bf16.mxu0 0
        %1096 = vmatmul.mubr.bf16.gmra.mxu0 %v935
        %v1097 = vpop.f32.mrf.mxu0
        %v1098 = vadd.f32 %v1049, %v1097
        %v1099 = vpop.f32.mrf.mxu0
        %v1100 = vpop.f32.mrf.mxu0
        %v1101 = vpop.f32.mrf.mxu0
        %1102 = vdwg.mxu0
        %v1103 = vmul.f32 %v972, 0.35355338
        %v1104 = vpack.c.bf16 %v1103, %v1103
        %v1105 = vpack.c.bf16 %v1035, %v1035
        %v1106 = vpack.c.bf16 %v1098, %v1098
        %v1108 = vlaneseq
        %v1109 = vshrl.u32 %v1108, 7
        %v1110 = vsub.s32 0, %v1109
        %v1111 = vrot.slane %v909, %v1110
        %vm1113 = vcmask 64512
        %v1115 = vsel %vm1113, %v1104, 0
        %v1118 = vsel %vm1113, %v1105, 0
        %1120 = vmatprep.subr.bf16.mxu0 0
        %1121 = vmatpush1.bf16.xpose.msra.mxu0 0
        %1122 = vmatprep.subr.bf16.mxu0 0
        %1123 = vmatpush1.bf16.xpose.msra.mxu0 0
        %1124 = vmatprep.subr.bf16.mxu0 0
        %1125 = vmatpush1.bf16.xpose.msra.mxu0 0
        %1126 = vmatprep.subr.bf16.mxu0 0
        %1127 = vmatpush1.bf16.xpose.msra.mxu0 0
        %1128 = vmatprep.subr.bf16.mxu0 0
        %1129 = vmatpush1.bf16.xpose.msra.mxu0 0
        %1130 = vmatprep.subr.bf16.mxu0 0
        %1131 = vmatpush1.bf16.xpose.msra.mxu0 0
        %1132 = vmatprep.subr.bf16.mxu0 0
        %1133 = vmatpush1.bf16.xpose.msra.mxu0 0
        %1134 = vmatprep.subr.bf16.mxu0 0
        %1135 = vmatpush1.bf16.xpose.msra.mxu0 %v1118
        %1136 = vmatprep.subr.bf16.mxu0 0
        %1137 = vmatpush2.bf16.xpose.msra.mxu0 0
        %1138 = vmatprep.subr.bf16.mxu0 0
        %1139 = vmatpush2.bf16.xpose.msra.mxu0 0
        %1140 = vmatprep.subr.bf16.mxu0 0
        %1141 = vmatpush2.bf16.xpose.msra.mxu0 0
        %1142 = vmatprep.subr.bf16.mxu0 0
        %1143 = vmatpush2.bf16.xpose.msra.mxu0 0
        %1144 = vmatprep.subr.bf16.mxu0 0
        %1145 = vmatpush2.bf16.xpose.msra.mxu0 0
        %1146 = vmatprep.subr.bf16.mxu0 0
        %1147 = vmatpush2.bf16.xpose.msra.mxu0 0
        %1148 = vmatprep.subr.bf16.mxu0 0
        %1149 = vmatpush2.bf16.xpose.msra.mxu0 0
        %1150 = vmatprep.subr.bf16.mxu0 0
        %1151 = vmatpush2.bf16.xpose.msra.mxu0 0
        %1152 = vmatprep.mubr.bf16.mxu0 0
        %1153 = vmatmul.mubr.bf16.gmra.mxu0 %v1115
        %v1154 = vpop.f32.mrf.mxu0
        %v1155 = vadd.f32 %v1111, %v1154
        %v1156 = vpop.f32.mrf.mxu0
        %v1157 = vpop.f32.mrf.mxu0
        %v1158 = vpop.f32.mrf.mxu0
        %1159 = vdwg.mxu0
        %v1160 = vsel %vm1113, %v1155, -inf
        %1161 = vmax.xlane.f32.xlu0 %v1160
        %v1162 = vpop.xlane.xlu0 %1161
        %v1163 = vsub.f32 %v1155, %v1162
        %v1164 = vmul.f32 %v1163, 1.442695
        %v1165 = vpow.pop %v1164
        %v1166 = vsel %vm1113, %v1165, 0.0
        %1167 = vadd.xlane.f32.xlu0 %v1166
        %v1168 = vpop.xlane.xlu0 %1167
        %v1169 = vrcp.pop %v1168
        %v1170 = vmul.f32 %v1165, %v1169
        %v1171 = vpack.c.bf16 %v1170, %v1170
        %v1173 = vsel %vm1113, %v1171, 0
        %vm1175 = vcmask 1043456
        %v1177 = vsel %vm1175, %v1106, 0
        %1179 = vmatprep.subr.bf16.mxu0 0
        %1180 = vmatpush1.bf16.msra.mxu0 0
        %1181 = vmatprep.subr.bf16.mxu0 0
        %1182 = vmatpush1.bf16.msra.mxu0 0
        %1183 = vmatprep.subr.bf16.mxu0 0
        %1184 = vmatpush1.bf16.msra.mxu0 0
        %1185 = vmatprep.subr.bf16.mxu0 0
        %1186 = vmatpush1.bf16.msra.mxu0 0
        %1187 = vmatprep.subr.bf16.mxu0 0
        %1188 = vmatpush1.bf16.msra.mxu0 0
        %1189 = vmatprep.subr.bf16.mxu0 0
        %1190 = vmatpush1.bf16.msra.mxu0 0
        %1191 = vmatprep.subr.bf16.mxu0 0
        %1192 = vmatpush1.bf16.msra.mxu0 0
        %1193 = vmatprep.subr.bf16.mxu0 0
        %1194 = vmatpush1.bf16.msra.mxu0 %v1177
        %1195 = vmatprep.subr.bf16.mxu0 0
        %1196 = vmatpush2.bf16.msra.mxu0 0
        %1197 = vmatprep.subr.bf16.mxu0 0
        %1198 = vmatpush2.bf16.msra.mxu0 0
        %1199 = vmatprep.subr.bf16.mxu0 0
        %1200 = vmatpush2.bf16.msra.mxu0 0
        %1201 = vmatprep.subr.bf16.mxu0 0
        %1202 = vmatpush2.bf16.msra.mxu0 0
        %1203 = vmatprep.subr.bf16.mxu0 0
        %1204 = vmatpush2.bf16.msra.mxu0 0
        %1205 = vmatprep.subr.bf16.mxu0 0
        %1206 = vmatpush2.bf16.msra.mxu0 0
        %1207 = vmatprep.subr.bf16.mxu0 0
        %1208 = vmatpush2.bf16.msra.mxu0 0
        %1209 = vmatprep.subr.bf16.mxu0 0
        %1210 = vmatpush2.bf16.msra.mxu0 0
        %1211 = vmatprep.mubr.bf16.mxu0 0
        %1212 = vmatmul.mubr.bf16.gmra.mxu0 %v1173
        %v1213 = vpop.f32.mrf.mxu0
        %v1214 = vadd.f32 0.0, %v1213
        %v1215 = vpop.f32.mrf.mxu0
        %v1216 = vpop.f32.mrf.mxu0
        %v1217 = vpop.f32.mrf.mxu0
        %1218 = vdwg.mxu0
        %v1219 = vpack.c.bf16 %v1214, %v1214
        %v1220 = vld [vmem:[%s865] sm:$0xf]
        %1222 = vrot.lane.b32.xlu0 %v1104, 120
        %v1223 = vpop.permute.xlu0 %1222
        %1225 = vrot.lane.b32.xlu0 %v1105, 120
        %v1226 = vpop.permute.xlu0 %1225
        %v1228 = vsel %vm1113, %v1223, 0
        %v1231 = vsel %vm1113, %v1226, 0
        %1233 = vmatprep.subr.bf16.mxu0 0
        %1234 = vmatpush1.bf16.xpose.msra.mxu0 0
        %1235 = vmatprep.subr.bf16.mxu0 0
        %1236 = vmatpush1.bf16.xpose.msra.mxu0 0
        %1237 = vmatprep.subr.bf16.mxu0 0
        %1238 = vmatpush1.bf16.xpose.msra.mxu0 0
        %1239 = vmatprep.subr.bf16.mxu0 0
        %1240 = vmatpush1.bf16.xpose.msra.mxu0 0
        %1241 = vmatprep.subr.bf16.mxu0 0
        %1242 = vmatpush1.bf16.xpose.msra.mxu0 0
        %1243 = vmatprep.subr.bf16.mxu0 0
        %1244 = vmatpush1.bf16.xpose.msra.mxu0 0
        %1245 = vmatprep.subr.bf16.mxu0 0
        %1246 = vmatpush1.bf16.xpose.msra.mxu0 0
        %1247 = vmatprep.subr.bf16.mxu0 0
        %1248 = vmatpush1.bf16.xpose.msra.mxu0 %v1231
        %1249 = vmatprep.subr.bf16.mxu0 0
        %1250 = vmatpush2.bf16.xpose.msra.mxu0 0
        %1251 = vmatprep.subr.bf16.mxu0 0
        %1252 = vmatpush2.bf16.xpose.msra.mxu0 0
        %1253 = vmatprep.subr.bf16.mxu0 0
        %1254 = vmatpush2.bf16.xpose.msra.mxu0 0
        %1255 = vmatprep.subr.bf16.mxu0 0
        %1256 = vmatpush2.bf16.xpose.msra.mxu0 0
        %1257 = vmatprep.subr.bf16.mxu0 0
        %1258 = vmatpush2.bf16.xpose.msra.mxu0 0
        %1259 = vmatprep.subr.bf16.mxu0 0
        %1260 = vmatpush2.bf16.xpose.msra.mxu0 0
        %1261 = vmatprep.subr.bf16.mxu0 0
        %1262 = vmatpush2.bf16.xpose.msra.mxu0 0
        %1263 = vmatprep.subr.bf16.mxu0 0
        %1264 = vmatpush2.bf16.xpose.msra.mxu0 0
        %1265 = vmatprep.mubr.bf16.mxu0 0
        %1266 = vmatmul.mubr.bf16.gmra.mxu0 %v1228
        %v1267 = vpop.f32.mrf.mxu0
        %v1268 = vadd.f32 %v1111, %v1267
        %v1269 = vpop.f32.mrf.mxu0
        %v1270 = vpop.f32.mrf.mxu0
        %v1271 = vpop.f32.mrf.mxu0
        %1272 = vdwg.mxu0
        %v1273 = vsel %vm1113, %v1268, -inf
        %1274 = vmax.xlane.f32.xlu0 %v1273
        %v1275 = vpop.xlane.xlu0 %1274
        %v1276 = vsub.f32 %v1268, %v1275
        %v1277 = vmul.f32 %v1276, 1.442695
        %v1278 = vpow.pop %v1277
        %v1279 = vsel %vm1113, %v1278, 0.0
        %1280 = vadd.xlane.f32.xlu0 %v1279
        %v1281 = vpop.xlane.xlu0 %1280
        %v1282 = vrcp.pop %v1281
        %v1283 = vmul.f32 %v1278, %v1282
        %v1284 = vpack.c.bf16 %v1283, %v1283
        %1286 = vrot.lane.b32.xlu0 %v1106, 120
        %v1287 = vpop.permute.xlu0 %1286
        %v1289 = vsel %vm1113, %v1284, 0
        %v1292 = vsel %vm1175, %v1287, 0
        %1294 = vmatprep.subr.bf16.mxu0 0
        %1295 = vmatpush1.bf16.msra.mxu0 0
        %1296 = vmatprep.subr.bf16.mxu0 0
        %1297 = vmatpush1.bf16.msra.mxu0 0
        %1298 = vmatprep.subr.bf16.mxu0 0
        %1299 = vmatpush1.bf16.msra.mxu0 0
        %1300 = vmatprep.subr.bf16.mxu0 0
        %1301 = vmatpush1.bf16.msra.mxu0 0
        %1302 = vmatprep.subr.bf16.mxu0 0
        %1303 = vmatpush1.bf16.msra.mxu0 0
        %1304 = vmatprep.subr.bf16.mxu0 0
        %1305 = vmatpush1.bf16.msra.mxu0 0
        %1306 = vmatprep.subr.bf16.mxu0 0
        %1307 = vmatpush1.bf16.msra.mxu0 0
        %1308 = vmatprep.subr.bf16.mxu0 0
        %1309 = vmatpush1.bf16.msra.mxu0 %v1292
        %1310 = vmatprep.subr.bf16.mxu0 0
        %1311 = vmatpush2.bf16.msra.mxu0 0
        %1312 = vmatprep.subr.bf16.mxu0 0
        %1313 = vmatpush2.bf16.msra.mxu0 0
        %1314 = vmatprep.subr.bf16.mxu0 0
        %1315 = vmatpush2.bf16.msra.mxu0 0
        %1316 = vmatprep.subr.bf16.mxu0 0
        %1317 = vmatpush2.bf16.msra.mxu0 0
        %1318 = vmatprep.subr.bf16.mxu0 0
        %1319 = vmatpush2.bf16.msra.mxu0 0
        %1320 = vmatprep.subr.bf16.mxu0 0
        %1321 = vmatpush2.bf16.msra.mxu0 0
        %1322 = vmatprep.subr.bf16.mxu0 0
        %1323 = vmatpush2.bf16.msra.mxu0 0
        %1324 = vmatprep.subr.bf16.mxu0 0
        %1325 = vmatpush2.bf16.msra.mxu0 0
        %1326 = vmatprep.mubr.bf16.mxu0 0
        %1327 = vmatmul.mubr.bf16.gmra.mxu0 %v1289
        %v1328 = vpop.f32.mrf.mxu0
        %v1329 = vadd.f32 0.0, %v1328
        %v1330 = vpop.f32.mrf.mxu0
        %v1331 = vpop.f32.mrf.mxu0
        %v1332 = vpop.f32.mrf.mxu0
        %1333 = vdwg.mxu0
        %v1334 = vpack.c.bf16 %v1329, %v1329
        %v1335 = vld [vmem:[%s865 + $0x4] sm:$0xf]
        %v1337 = vsel %vm1113, %v1334, 0
        %v1340 = vsel %vm1175, %v1335, 0
        %1342 = vmatprep.subr.bf16.mxu0 0
        %1343 = vmatpush1.bf16.msra.mxu0 0
        %1344 = vmatprep.subr.bf16.mxu0 0
        %1345 = vmatpush1.bf16.msra.mxu0 0
        %1346 = vmatprep.subr.bf16.mxu0 0
        %1347 = vmatpush1.bf16.msra.mxu0 0
        %1348 = vmatprep.subr.bf16.mxu0 0
        %1349 = vmatpush1.bf16.msra.mxu0 0
        %1350 = vmatprep.subr.bf16.mxu0 0
        %1351 = vmatpush1.bf16.msra.mxu0 0
        %1352 = vmatprep.subr.bf16.mxu0 0
        %1353 = vmatpush1.bf16.msra.mxu0 0
        %1354 = vmatprep.subr.bf16.mxu0 0
        %1355 = vmatpush1.bf16.msra.mxu0 0
        %1356 = vmatprep.subr.bf16.mxu0 0
        %1357 = vmatpush1.bf16.msra.mxu0 %v1340
        %1358 = vmatprep.subr.bf16.mxu0 0
        %1359 = vmatpush2.bf16.msra.mxu0 0
        %1360 = vmatprep.subr.bf16.mxu0 0
        %1361 = vmatpush2.bf16.msra.mxu0 0
        %1362 = vmatprep.subr.bf16.mxu0 0
        %1363 = vmatpush2.bf16.msra.mxu0 0
        %1364 = vmatprep.subr.bf16.mxu0 0
        %1365 = vmatpush2.bf16.msra.mxu0 0
        %1366 = vmatprep.subr.bf16.mxu0 0
        %1367 = vmatpush2.bf16.msra.mxu0 0
        %1368 = vmatprep.subr.bf16.mxu0 0
        %1369 = vmatpush2.bf16.msra.mxu0 0
        %1370 = vmatprep.subr.bf16.mxu0 0
        %1371 = vmatpush2.bf16.msra.mxu0 0
        %1372 = vmatprep.subr.bf16.mxu0 0
        %1373 = vmatpush2.bf16.msra.mxu0 0
        %1374 = vmatprep.mubr.bf16.mxu0 0
        %1375 = vmatmul.mubr.bf16.gmra.mxu0 %v1337
        %v1376 = vpop.f32.mrf.mxu0
        %v1377 = vadd.f32 0.0, %v1376
        %v1378 = vpop.f32.mrf.mxu0
        %v1379 = vpop.f32.mrf.mxu0
        %v1380 = vpop.f32.mrf.mxu0
        %1381 = vdwg.mxu0
        %v1383 = vsel %vm1113, %v1219, 0
        %v1386 = vsel %vm1175, %v1220, 0
        %1388 = vmatprep.subr.bf16.mxu0 0
        %1389 = vmatpush1.bf16.msra.mxu0 0
        %1390 = vmatprep.subr.bf16.mxu0 0
        %1391 = vmatpush1.bf16.msra.mxu0 0
        %1392 = vmatprep.subr.bf16.mxu0 0
        %1393 = vmatpush1.bf16.msra.mxu0 0
        %1394 = vmatprep.subr.bf16.mxu0 0
        %1395 = vmatpush1.bf16.msra.mxu0 0
        %1396 = vmatprep.subr.bf16.mxu0 0
        %1397 = vmatpush1.bf16.msra.mxu0 0
        %1398 = vmatprep.subr.bf16.mxu0 0
        %1399 = vmatpush1.bf16.msra.mxu0 0
        %1400 = vmatprep.subr.bf16.mxu0 0
        %1401 = vmatpush1.bf16.msra.mxu0 0
        %1402 = vmatprep.subr.bf16.mxu0 0
        %1403 = vmatpush1.bf16.msra.mxu0 %v1386
        %1404 = vmatprep.subr.bf16.mxu0 0
        %1405 = vmatpush2.bf16.msra.mxu0 0
        %1406 = vmatprep.subr.bf16.mxu0 0
        %1407 = vmatpush2.bf16.msra.mxu0 0
        %1408 = vmatprep.subr.bf16.mxu0 0
        %1409 = vmatpush2.bf16.msra.mxu0 0
        %1410 = vmatprep.subr.bf16.mxu0 0
        %1411 = vmatpush2.bf16.msra.mxu0 0
        %1412 = vmatprep.subr.bf16.mxu0 0
        %1413 = vmatpush2.bf16.msra.mxu0 0
        %1414 = vmatprep.subr.bf16.mxu0 0
        %1415 = vmatpush2.bf16.msra.mxu0 0
        %1416 = vmatprep.subr.bf16.mxu0 0
        %1417 = vmatpush2.bf16.msra.mxu0 0
        %1418 = vmatprep.subr.bf16.mxu0 0
        %1419 = vmatpush2.bf16.msra.mxu0 0
        %1420 = vmatprep.mubr.bf16.mxu0 0
        %1421 = vmatmul.mubr.bf16.gmra.mxu0 %v1383
        %v1422 = vpop.f32.mrf.mxu0
        %v1423 = vadd.f32 %v1377, %v1422
        %v1424 = vpop.f32.mrf.mxu0
        %v1425 = vpop.f32.mrf.mxu0
        %v1426 = vpop.f32.mrf.mxu0
        %1427 = vdwg.mxu0
        %1428 = vrot.lane.b32.xlu0 %v1104, 112
        %v1429 = vpop.permute.xlu0 %1428
        %1430 = vrot.lane.b32.xlu0 %v1105, 112
        %v1431 = vpop.permute.xlu0 %1430
        %v1433 = vsel %vm1113, %v1429, 0
        %v1436 = vsel %vm1113, %v1431, 0
        %1438 = vmatprep.subr.bf16.mxu0 0
        %1439 = vmatpush1.bf16.xpose.msra.mxu0 0
        %1440 = vmatprep.subr.bf16.mxu0 0
        %1441 = vmatpush1.bf16.xpose.msra.mxu0 0
        %1442 = vmatprep.subr.bf16.mxu0 0
        %1443 = vmatpush1.bf16.xpose.msra.mxu0 0
        %1444 = vmatprep.subr.bf16.mxu0 0
        %1445 = vmatpush1.bf16.xpose.msra.mxu0 0
        %1446 = vmatprep.subr.bf16.mxu0 0
        %1447 = vmatpush1.bf16.xpose.msra.mxu0 0
        %1448 = vmatprep.subr.bf16.mxu0 0
        %1449 = vmatpush1.bf16.xpose.msra.mxu0 0
        %1450 = vmatprep.subr.bf16.mxu0 0
        %1451 = vmatpush1.bf16.xpose.msra.mxu0 0
        %1452 = vmatprep.subr.bf16.mxu0 0
        %1453 = vmatpush1.bf16.xpose.msra.mxu0 %v1436
        %1454 = vmatprep.subr.bf16.mxu0 0
        %1455 = vmatpush2.bf16.xpose.msra.mxu0 0
        %1456 = vmatprep.subr.bf16.mxu0 0
        %1457 = vmatpush2.bf16.xpose.msra.mxu0 0
        %1458 = vmatprep.subr.bf16.mxu0 0
        %1459 = vmatpush2.bf16.xpose.msra.mxu0 0
        %1460 = vmatprep.subr.bf16.mxu0 0
        %1461 = vmatpush2.bf16.xpose.msra.mxu0 0
        %1462 = vmatprep.subr.bf16.mxu0 0
        %1463 = vmatpush2.bf16.xpose.msra.mxu0 0
        %1464 = vmatprep.subr.bf16.mxu0 0
        %1465 = vmatpush2.bf16.xpose.msra.mxu0 0
        %1466 = vmatprep.subr.bf16.mxu0 0
        %1467 = vmatpush2.bf16.xpose.msra.mxu0 0
        %1468 = vmatprep.subr.bf16.mxu0 0
        %1469 = vmatpush2.bf16.xpose.msra.mxu0 0
        %1470 = vmatprep.mubr.bf16.mxu0 0
        %1471 = vmatmul.mubr.bf16.gmra.mxu0 %v1433
        %v1472 = vpop.f32.mrf.mxu0
        %v1473 = vadd.f32 %v1111, %v1472
        %v1474 = vpop.f32.mrf.mxu0
        %v1475 = vpop.f32.mrf.mxu0
        %v1476 = vpop.f32.mrf.mxu0
        %1477 = vdwg.mxu0
        %v1478 = vsel %vm1113, %v1473, -inf
        %1479 = vmax.xlane.f32.xlu0 %v1478
        %v1480 = vpop.xlane.xlu0 %1479
        %v1481 = vsub.f32 %v1473, %v1480
        %v1482 = vmul.f32 %v1481, 1.442695
        %v1483 = vpow.pop %v1482
        %v1484 = vsel %vm1113, %v1483, 0.0
        %1485 = vadd.xlane.f32.xlu0 %v1484
        %v1486 = vpop.xlane.xlu0 %1485
        %v1487 = vrcp.pop %v1486
        %v1488 = vmul.f32 %v1483, %v1487
        %v1489 = vpack.c.bf16 %v1488, %v1488
        %1490 = vrot.lane.b32.xlu0 %v1106, 112
        %v1491 = vpop.permute.xlu0 %1490
        %v1493 = vsel %vm1113, %v1489, 0
        %v1496 = vsel %vm1175, %v1491, 0
        %1498 = vmatprep.subr.bf16.mxu0 0
        %1499 = vmatpush1.bf16.msra.mxu0 0
        %1500 = vmatprep.subr.bf16.mxu0 0
        %1501 = vmatpush1.bf16.msra.mxu0 0
        %1502 = vmatprep.subr.bf16.mxu0 0
        %1503 = vmatpush1.bf16.msra.mxu0 0
        %1504 = vmatprep.subr.bf16.mxu0 0
        %1505 = vmatpush1.bf16.msra.mxu0 0
        %1506 = vmatprep.subr.bf16.mxu0 0
        %1507 = vmatpush1.bf16.msra.mxu0 0
        %1508 = vmatprep.subr.bf16.mxu0 0
        %1509 = vmatpush1.bf16.msra.mxu0 0
        %1510 = vmatprep.subr.bf16.mxu0 0
        %1511 = vmatpush1.bf16.msra.mxu0 0
        %1512 = vmatprep.subr.bf16.mxu0 0
        %1513 = vmatpush1.bf16.msra.mxu0 %v1496
        %1514 = vmatprep.subr.bf16.mxu0 0
        %1515 = vmatpush2.bf16.msra.mxu0 0
        %1516 = vmatprep.subr.bf16.mxu0 0
        %1517 = vmatpush2.bf16.msra.mxu0 0
        %1518 = vmatprep.subr.bf16.mxu0 0
        %1519 = vmatpush2.bf16.msra.mxu0 0
        %1520 = vmatprep.subr.bf16.mxu0 0
        %1521 = vmatpush2.bf16.msra.mxu0 0
        %1522 = vmatprep.subr.bf16.mxu0 0
        %1523 = vmatpush2.bf16.msra.mxu0 0
        %1524 = vmatprep.subr.bf16.mxu0 0
        %1525 = vmatpush2.bf16.msra.mxu0 0
        %1526 = vmatprep.subr.bf16.mxu0 0
        %1527 = vmatpush2.bf16.msra.mxu0 0
        %1528 = vmatprep.subr.bf16.mxu0 0
        %1529 = vmatpush2.bf16.msra.mxu0 0
        %1530 = vmatprep.mubr.bf16.mxu0 0
        %1531 = vmatmul.mubr.bf16.gmra.mxu0 %v1493
        %v1532 = vpop.f32.mrf.mxu0
        %v1533 = vadd.f32 0.0, %v1532
        %v1534 = vpop.f32.mrf.mxu0
        %v1535 = vpop.f32.mrf.mxu0
        %v1536 = vpop.f32.mrf.mxu0
        %1537 = vdwg.mxu0
        %v1538 = vpack.c.bf16 %v1533, %v1533
        %v1539 = vld [vmem:[%s865 + $0x8] sm:$0xf]
        %v1541 = vsel %vm1113, %v1538, 0
        %v1544 = vsel %vm1175, %v1539, 0
        %1546 = vmatprep.subr.bf16.mxu0 0
        %1547 = vmatpush1.bf16.msra.mxu0 0
        %1548 = vmatprep.subr.bf16.mxu0 0
        %1549 = vmatpush1.bf16.msra.mxu0 0
        %1550 = vmatprep.subr.bf16.mxu0 0
        %1551 = vmatpush1.bf16.msra.mxu0 0
        %1552 = vmatprep.subr.bf16.mxu0 0
        %1553 = vmatpush1.bf16.msra.mxu0 0
        %1554 = vmatprep.subr.bf16.mxu0 0
        %1555 = vmatpush1.bf16.msra.mxu0 0
        %1556 = vmatprep.subr.bf16.mxu0 0
        %1557 = vmatpush1.bf16.msra.mxu0 0
        %1558 = vmatprep.subr.bf16.mxu0 0
        %1559 = vmatpush1.bf16.msra.mxu0 0
        %1560 = vmatprep.subr.bf16.mxu0 0
        %1561 = vmatpush1.bf16.msra.mxu0 %v1544
        %1562 = vmatprep.subr.bf16.mxu0 0
        %1563 = vmatpush2.bf16.msra.mxu0 0
        %1564 = vmatprep.subr.bf16.mxu0 0
        %1565 = vmatpush2.bf16.msra.mxu0 0
        %1566 = vmatprep.subr.bf16.mxu0 0
        %1567 = vmatpush2.bf16.msra.mxu0 0
        %1568 = vmatprep.subr.bf16.mxu0 0
        %1569 = vmatpush2.bf16.msra.mxu0 0
        %1570 = vmatprep.subr.bf16.mxu0 0
        %1571 = vmatpush2.bf16.msra.mxu0 0
        %1572 = vmatprep.subr.bf16.mxu0 0
        %1573 = vmatpush2.bf16.msra.mxu0 0
        %1574 = vmatprep.subr.bf16.mxu0 0
        %1575 = vmatpush2.bf16.msra.mxu0 0
        %1576 = vmatprep.subr.bf16.mxu0 0
        %1577 = vmatpush2.bf16.msra.mxu0 0
        %1578 = vmatprep.mubr.bf16.mxu0 0
        %1579 = vmatmul.mubr.bf16.gmra.mxu0 %v1541
        %v1580 = vpop.f32.mrf.mxu0
        %v1581 = vadd.f32 0.0, %v1580
        %v1582 = vpop.f32.mrf.mxu0
        %v1583 = vpop.f32.mrf.mxu0
        %v1584 = vpop.f32.mrf.mxu0
        %1585 = vdwg.mxu0
        %v1586 = vadd.f32 %v1423, %v1581
        %1587 = vrot.lane.b32.xlu0 %v1104, 104
        %v1588 = vpop.permute.xlu0 %1587
        %1589 = vrot.lane.b32.xlu0 %v1105, 104
        %v1590 = vpop.permute.xlu0 %1589
        %v1592 = vsel %vm1113, %v1588, 0
        %v1595 = vsel %vm1113, %v1590, 0
        %1597 = vmatprep.subr.bf16.mxu0 0
        %1598 = vmatpush1.bf16.xpose.msra.mxu0 0
        %1599 = vmatprep.subr.bf16.mxu0 0
        %1600 = vmatpush1.bf16.xpose.msra.mxu0 0
        %1601 = vmatprep.subr.bf16.mxu0 0
        %1602 = vmatpush1.bf16.xpose.msra.mxu0 0
        %1603 = vmatprep.subr.bf16.mxu0 0
        %1604 = vmatpush1.bf16.xpose.msra.mxu0 0
        %1605 = vmatprep.subr.bf16.mxu0 0
        %1606 = vmatpush1.bf16.xpose.msra.mxu0 0
        %1607 = vmatprep.subr.bf16.mxu0 0
        %1608 = vmatpush1.bf16.xpose.msra.mxu0 0
        %1609 = vmatprep.subr.bf16.mxu0 0
        %1610 = vmatpush1.bf16.xpose.msra.mxu0 0
        %1611 = vmatprep.subr.bf16.mxu0 0
        %1612 = vmatpush1.bf16.xpose.msra.mxu0 %v1595
        %1613 = vmatprep.subr.bf16.mxu0 0
        %1614 = vmatpush2.bf16.xpose.msra.mxu0 0
        %1615 = vmatprep.subr.bf16.mxu0 0
        %1616 = vmatpush2.bf16.xpose.msra.mxu0 0
        %1617 = vmatprep.subr.bf16.mxu0 0
        %1618 = vmatpush2.bf16.xpose.msra.mxu0 0
        %1619 = vmatprep.subr.bf16.mxu0 0
        %1620 = vmatpush2.bf16.xpose.msra.mxu0 0
        %1621 = vmatprep.subr.bf16.mxu0 0
        %1622 = vmatpush2.bf16.xpose.msra.mxu0 0
        %1623 = vmatprep.subr.bf16.mxu0 0
        %1624 = vmatpush2.bf16.xpose.msra.mxu0 0
        %1625 = vmatprep.subr.bf16.mxu0 0
        %1626 = vmatpush2.bf16.xpose.msra.mxu0 0
        %1627 = vmatprep.subr.bf16.mxu0 0
        %1628 = vmatpush2.bf16.xpose.msra.mxu0 0
        %1629 = vmatprep.mubr.bf16.mxu0 0
        %1630 = vmatmul.mubr.bf16.gmra.mxu0 %v1592
        %v1631 = vpop.f32.mrf.mxu0
        %v1632 = vadd.f32 %v1111, %v1631
        %v1633 = vpop.f32.mrf.mxu0
        %v1634 = vpop.f32.mrf.mxu0
        %v1635 = vpop.f32.mrf.mxu0
        %1636 = vdwg.mxu0
        %v1637 = vsel %vm1113, %v1632, -inf
        %1638 = vmax.xlane.f32.xlu0 %v1637
        %v1639 = vpop.xlane.xlu0 %1638
        %v1640 = vsub.f32 %v1632, %v1639
        %v1641 = vmul.f32 %v1640, 1.442695
        %v1642 = vpow.pop %v1641
        %v1643 = vsel %vm1113, %v1642, 0.0
        %1644 = vadd.xlane.f32.xlu0 %v1643
        %v1645 = vpop.xlane.xlu0 %1644
        %v1646 = vrcp.pop %v1645
        %v1647 = vmul.f32 %v1642, %v1646
        %v1648 = vpack.c.bf16 %v1647, %v1647
        %1649 = vrot.lane.b32.xlu0 %v1106, 104
        %v1650 = vpop.permute.xlu0 %1649
        %v1652 = vsel %vm1113, %v1648, 0
        %v1655 = vsel %vm1175, %v1650, 0
        %1657 = vmatprep.subr.bf16.mxu0 0
        %1658 = vmatpush1.bf16.msra.mxu0 0
        %1659 = vmatprep.subr.bf16.mxu0 0
        %1660 = vmatpush1.bf16.msra.mxu0 0
        %1661 = vmatprep.subr.bf16.mxu0 0
        %1662 = vmatpush1.bf16.msra.mxu0 0
        %1663 = vmatprep.subr.bf16.mxu0 0
        %1664 = vmatpush1.bf16.msra.mxu0 0
        %1665 = vmatprep.subr.bf16.mxu0 0
        %1666 = vmatpush1.bf16.msra.mxu0 0
        %1667 = vmatprep.subr.bf16.mxu0 0
        %1668 = vmatpush1.bf16.msra.mxu0 0
        %1669 = vmatprep.subr.bf16.mxu0 0
        %1670 = vmatpush1.bf16.msra.mxu0 0
        %1671 = vmatprep.subr.bf16.mxu0 0
        %1672 = vmatpush1.bf16.msra.mxu0 %v1655
        %1673 = vmatprep.subr.bf16.mxu0 0
        %1674 = vmatpush2.bf16.msra.mxu0 0
        %1675 = vmatprep.subr.bf16.mxu0 0
        %1676 = vmatpush2.bf16.msra.mxu0 0
        %1677 = vmatprep.subr.bf16.mxu0 0
        %1678 = vmatpush2.bf16.msra.mxu0 0
        %1679 = vmatprep.subr.bf16.mxu0 0
        %1680 = vmatpush2.bf16.msra.mxu0 0
        %1681 = vmatprep.subr.bf16.mxu0 0
        %1682 = vmatpush2.bf16.msra.mxu0 0
        %1683 = vmatprep.subr.bf16.mxu0 0
        %1684 = vmatpush2.bf16.msra.mxu0 0
        %1685 = vmatprep.subr.bf16.mxu0 0
        %1686 = vmatpush2.bf16.msra.mxu0 0
        %1687 = vmatprep.subr.bf16.mxu0 0
        %1688 = vmatpush2.bf16.msra.mxu0 0
        %1689 = vmatprep.mubr.bf16.mxu0 0
        %1690 = vmatmul.mubr.bf16.gmra.mxu0 %v1652
        %v1691 = vpop.f32.mrf.mxu0
        %v1692 = vadd.f32 0.0, %v1691
        %v1693 = vpop.f32.mrf.mxu0
        %v1694 = vpop.f32.mrf.mxu0
        %v1695 = vpop.f32.mrf.mxu0
        %1696 = vdwg.mxu0
        %v1697 = vpack.c.bf16 %v1692, %v1692
        %v1698 = vld [vmem:[%s865 + $0xc] sm:$0xf]
        %v1700 = vsel %vm1113, %v1697, 0
        %v1703 = vsel %vm1175, %v1698, 0
        %1705 = vmatprep.subr.bf16.mxu0 0
        %1706 = vmatpush1.bf16.msra.mxu0 0
        %1707 = vmatprep.subr.bf16.mxu0 0
        %1708 = vmatpush1.bf16.msra.mxu0 0
        %1709 = vmatprep.subr.bf16.mxu0 0
        %1710 = vmatpush1.bf16.msra.mxu0 0
        %1711 = vmatprep.subr.bf16.mxu0 0
        %1712 = vmatpush1.bf16.msra.mxu0 0
        %1713 = vmatprep.subr.bf16.mxu0 0
        %1714 = vmatpush1.bf16.msra.mxu0 0
        %1715 = vmatprep.subr.bf16.mxu0 0
        %1716 = vmatpush1.bf16.msra.mxu0 0
        %1717 = vmatprep.subr.bf16.mxu0 0
        %1718 = vmatpush1.bf16.msra.mxu0 0
        %1719 = vmatprep.subr.bf16.mxu0 0
        %1720 = vmatpush1.bf16.msra.mxu0 %v1703
        %1721 = vmatprep.subr.bf16.mxu0 0
        %1722 = vmatpush2.bf16.msra.mxu0 0
        %1723 = vmatprep.subr.bf16.mxu0 0
        %1724 = vmatpush2.bf16.msra.mxu0 0
        %1725 = vmatprep.subr.bf16.mxu0 0
        %1726 = vmatpush2.bf16.msra.mxu0 0
        %1727 = vmatprep.subr.bf16.mxu0 0
        %1728 = vmatpush2.bf16.msra.mxu0 0
        %1729 = vmatprep.subr.bf16.mxu0 0
        %1730 = vmatpush2.bf16.msra.mxu0 0
        %1731 = vmatprep.subr.bf16.mxu0 0
        %1732 = vmatpush2.bf16.msra.mxu0 0
        %1733 = vmatprep.subr.bf16.mxu0 0
        %1734 = vmatpush2.bf16.msra.mxu0 0
        %1735 = vmatprep.subr.bf16.mxu0 0
        %1736 = vmatpush2.bf16.msra.mxu0 0
        %1737 = vmatprep.mubr.bf16.mxu0 0
        %1738 = vmatmul.mubr.bf16.gmra.mxu0 %v1700
        %v1739 = vpop.f32.mrf.mxu0
        %v1740 = vadd.f32 0.0, %v1739
        %v1741 = vpop.f32.mrf.mxu0
        %v1742 = vpop.f32.mrf.mxu0
        %v1743 = vpop.f32.mrf.mxu0
        %1744 = vdwg.mxu0
        %v1745 = vadd.f32 %v1586, %v1740
        %v1746 = vadd.f32 %v905, %v1745
        %v1747 = vld [vmem:[%s868] sm:$0x1]
        %v1749 = vlaneseq
        %v1750 = vshrl.u32 %v1749, 7
        %v1751 = vsub.s32 0, %v1750
        %v1752 = vrot.slane %v1747, %v1751
        %v1754 = vadd.f32 %v1746, %v1752
        %v1755 = vsel %vm933, %v1754, 0.0
        %1756 = vadd.xlane.f32.xlu0 %v1755
        %v1757 = vpop.xlane.xlu0 %1756
        %v1758 = vrcp.pop 32.0
        %v1759 = vmul.f32 %v1757, %v1758
        %v1760 = vsub.f32 %v1754, %v1759
        %v1761 = vmul.f32 %v1760, %v1760
        %v1762 = vsel %vm933, %v1761, 0.0
        %1763 = vadd.xlane.f32.xlu0 %v1762
        %v1764 = vpop.xlane.xlu0 %1763
        %v1765 = vmul.f32 %v1764, %v1758
        %v1766 = vadd.f32 %v1765, 1e-05
        %v1767 = vrsqrt.pop %v1766
        %v1768 = vmul.f32 %v1760, %v1767
        %v1769 = vld [vmem:[%s871] sm:$0x1]
        %v1771 = vlaneseq
        %v1772 = vshrl.u32 %v1771, 7
        %v1773 = vsub.s32 0, %v1772
        %v1774 = vrot.slane %v1769, %v1773
        %v1776 = vmul.f32 %v1768, %v1774
        %v1777 = vld [vmem:[%s874] sm:$0x1]
        %v1779 = vlaneseq
        %v1780 = vshrl.u32 %v1779, 7
        %v1781 = vsub.s32 0, %v1780
        %v1782 = vrot.slane %v1777, %v1781
        %v1784 = vadd.f32 %v1776, %v1782
        %v1785 = vpack.c.bf16 %v1784, %v1784
        %v1786 = vld [vmem:[%s879] sm:$0xf]
        %v1787 = vld [vmem:[%s879 + $0x4] sm:$0xf]
        %v1788 = vld [vmem:[%s879 + $0x8] sm:$0xf]
        %v1789 = vld [vmem:[%s879 + $0xc] sm:$0xf]
        %v1790 = vld [vmem:[%s882] sm:$0x1]
        %v1792 = vlaneseq
        %v1793 = vshrl.u32 %v1792, 7
        %v1794 = vsub.s32 0, %v1793
        %v1795 = vrot.slane %v1790, %v1794
        %v1801 = vunpack.c.l.b16 %v1786
        %v1802 = vunpack.c.l.b16 %v1787
        %v1803 = vunpack.c.l.b16 %v1788
        %v1804 = vunpack.c.l.b16 %v1789
        %v1805 = vpack.c.b16 %v1802, %v1801
        %v1806 = vpack.c.b16 %v1804, %v1803
        %v1810 = vsel %vm933, %v1785, 0
        %1812 = vmatprep.subr.bf16.mxu0 0
        %1813 = vmatpush1.bf16.msra.mxu0 0
        %1814 = vmatprep.subr.bf16.mxu0 0
        %1815 = vmatpush1.bf16.msra.mxu0 0
        %1816 = vmatprep.subr.bf16.mxu0 0
        %1817 = vmatpush1.bf16.msra.mxu0 0
        %1818 = vmatprep.subr.bf16.mxu0 0
        %1819 = vmatpush1.bf16.msra.mxu0 0
        %1820 = vmatprep.subr.bf16.mxu0 0
        %1821 = vmatpush1.bf16.msra.mxu0 0
        %1822 = vmatprep.subr.bf16.mxu0 0
        %1823 = vmatpush1.bf16.msra.mxu0 0
        %1824 = vmatprep.subr.bf16.mxu0 0
        %1825 = vmatpush1.bf16.msra.mxu0 %v1806
        %1826 = vmatprep.subr.bf16.mxu0 0
        %1827 = vmatpush1.bf16.msra.mxu0 %v1805
        %1828 = vmatprep.subr.bf16.mxu0 0
        %1829 = vmatpush2.bf16.msra.mxu0 0
        %1830 = vmatprep.subr.bf16.mxu0 0
        %1831 = vmatpush2.bf16.msra.mxu0 0
        %1832 = vmatprep.subr.bf16.mxu0 0
        %1833 = vmatpush2.bf16.msra.mxu0 0
        %1834 = vmatprep.subr.bf16.mxu0 0
        %1835 = vmatpush2.bf16.msra.mxu0 0
        %1836 = vmatprep.subr.bf16.mxu0 0
        %1837 = vmatpush2.bf16.msra.mxu0 0
        %1838 = vmatprep.subr.bf16.mxu0 0
        %1839 = vmatpush2.bf16.msra.mxu0 0
        %1840 = vmatprep.subr.bf16.mxu0 0
        %1841 = vmatpush2.bf16.msra.mxu0 0
        %1842 = vmatprep.subr.bf16.mxu0 0
        %1843 = vmatpush2.bf16.msra.mxu0 0
        %1844 = vmatprep.mubr.bf16.mxu0 0
        %1845 = vmatmul.mubr.bf16.gmra.mxu0 %v1810
        %v1846 = vpop.f32.mrf.mxu0
        %v1847 = vadd.f32 %v1795, %v1846
        %v1848 = vpop.f32.mrf.mxu0
        %v1849 = vpop.f32.mrf.mxu0
        %v1850 = vpop.f32.mrf.mxu0
        %1851 = vdwg.mxu0
        %v1852 = vmax.f32 %v1847, 0.0
        %v1853 = vpack.c.bf16 %v1852, %v1852
        %v1854 = vld [vmem:[%s887] sm:$0xf]
        %v1855 = vld [vmem:[%s887 + $0x4] sm:$0xf]
        %v1856 = vld [vmem:[%s887 + $0x8] sm:$0xf]
        %v1857 = vld [vmem:[%s887 + $0xc] sm:$0xf]
        %v1858 = vld [vmem:[%s887 + $0x10] sm:$0xf]
        %v1859 = vld [vmem:[%s887 + $0x14] sm:$0xf]
        %v1860 = vld [vmem:[%s887 + $0x18] sm:$0xf]
        %v1861 = vld [vmem:[%s887 + $0x1c] sm:$0xf]
        %v1862 = vld [vmem:[%s887 + $0x20] sm:$0xf]
        %v1863 = vld [vmem:[%s887 + $0x24] sm:$0xf]
        %v1864 = vld [vmem:[%s887 + $0x28] sm:$0xf]
        %v1865 = vld [vmem:[%s887 + $0x2c] sm:$0xf]
        %v1866 = vld [vmem:[%s887 + $0x30] sm:$0xf]
        %v1867 = vld [vmem:[%s887 + $0x34] sm:$0xf]
        %v1868 = vld [vmem:[%s887 + $0x38] sm:$0xf]
        %v1869 = vld [vmem:[%s887 + $0x3c] sm:$0xf]
        %v1886 = vunpack.c.l.b16 %v1854
        %v1887 = vunpack.c.l.b16 %v1855
        %v1888 = vunpack.c.l.b16 %v1856
        %v1889 = vunpack.c.l.b16 %v1857
        %v1890 = vunpack.c.l.b16 %v1858
        %v1891 = vunpack.c.l.b16 %v1859
        %v1892 = vunpack.c.l.b16 %v1860
        %v1893 = vunpack.c.l.b16 %v1861
        %v1894 = vunpack.c.l.b16 %v1862
        %v1895 = vunpack.c.l.b16 %v1863
        %v1896 = vunpack.c.l.b16 %v1864
        %v1897 = vunpack.c.l.b16 %v1865
        %v1898 = vunpack.c.l.b16 %v1866
        %v1899 = vunpack.c.l.b16 %v1867
        %v1900 = vunpack.c.l.b16 %v1868
        %v1901 = vunpack.c.l.b16 %v1869
        %v1902 = vpack.c.b16 %v1887, %v1886
        %v1903 = vpack.c.b16 %v1889, %v1888
        %v1904 = vpack.c.b16 %v1891, %v1890
        %v1905 = vpack.c.b16 %v1893, %v1892
        %v1906 = vpack.c.b16 %v1895, %v1894
        %v1907 = vpack.c.b16 %v1897, %v1896
        %v1908 = vpack.c.b16 %v1899, %v1898
        %v1909 = vpack.c.b16 %v1901, %v1900
        %1918 = vmatprep.subr.bf16.mxu0 0
        %1919 = vmatpush1.bf16.msra.mxu0 %v1909
        %1920 = vmatprep.subr.bf16.mxu0 0
        %1921 = vmatpush1.bf16.msra.mxu0 %v1908
        %1922 = vmatprep.subr.bf16.mxu0 0
        %1923 = vmatpush1.bf16.msra.mxu0 %v1907
        %1924 = vmatprep.subr.bf16.mxu0 0
        %1925 = vmatpush1.bf16.msra.mxu0 %v1906
        %1926 = vmatprep.subr.bf16.mxu0 0
        %1927 = vmatpush1.bf16.msra.mxu0 %v1905
        %1928 = vmatprep.subr.bf16.mxu0 0
        %1929 = vmatpush1.bf16.msra.mxu0 %v1904
        %1930 = vmatprep.subr.bf16.mxu0 0
        %1931 = vmatpush1.bf16.msra.mxu0 %v1903
        %1932 = vmatprep.subr.bf16.mxu0 0
        %1933 = vmatpush1.bf16.msra.mxu0 %v1902
        %1934 = vmatprep.subr.bf16.mxu0 0
        %1935 = vmatpush2.bf16.msra.mxu0 0
        %1936 = vmatprep.subr.bf16.mxu0 0
        %1937 = vmatpush2.bf16.msra.mxu0 0
        %1938 = vmatprep.subr.bf16.mxu0 0
        %1939 = vmatpush2.bf16.msra.mxu0 0
        %1940 = vmatprep.subr.bf16.mxu0 0
        %1941 = vmatpush2.bf16.msra.mxu0 0
        %1942 = vmatprep.subr.bf16.mxu0 0
        %1943 = vmatpush2.bf16.msra.mxu0 0
        %1944 = vmatprep.subr.bf16.mxu0 0
        %1945 = vmatpush2.bf16.msra.mxu0 0
        %1946 = vmatprep.subr.bf16.mxu0 0
        %1947 = vmatpush2.bf16.msra.mxu0 0
        %1948 = vmatprep.subr.bf16.mxu0 0
        %1949 = vmatpush2.bf16.msra.mxu0 0
        %1950 = vmatprep.mubr.bf16.mxu0 0
        %1951 = vmatmul.mubr.bf16.gmra.mxu0 %v1853
        %v1952 = vpop.f32.mrf.mxu0
        %v1953 = vadd.f32 0.0, %v1952
        %v1954 = vpop.f32.mrf.mxu0
        %v1955 = vpop.f32.mrf.mxu0
        %v1956 = vpop.f32.mrf.mxu0
        %1957 = vdwg.mxu0
        %v1958 = vadd.f32 %v1784, %v1953
        %v1959 = vld [vmem:[%s890] sm:$0x1]
        %v1961 = vlaneseq
        %v1962 = vshrl.u32 %v1961, 7
        %v1963 = vsub.s32 0, %v1962
        %v1964 = vrot.slane %v1959, %v1963
        %v1966 = vadd.f32 %v1958, %v1964
        %v1967 = vsel %vm933, %v1966, 0.0
        %1968 = vadd.xlane.f32.xlu0 %v1967
        %v1969 = vpop.xlane.xlu0 %1968
        %v1970 = vmul.f32 %v1969, %v1758
        %v1971 = vsub.f32 %v1966, %v1970
        %v1972 = vmul.f32 %v1971, %v1971
        %v1973 = vsel %vm933, %v1972, 0.0
        %1974 = vadd.xlane.f32.xlu0 %v1973
        %v1975 = vpop.xlane.xlu0 %1974
        %v1976 = vmul.f32 %v1975, %v1758
        %v1977 = vadd.f32 %v1976, 1e-05
        %v1978 = vrsqrt.pop %v1977
        %v1979 = vmul.f32 %v1971, %v1978
        %v1980 = vld [vmem:[%s893] sm:$0x1]
        %v1982 = vlaneseq
        %v1983 = vshrl.u32 %v1982, 7
        %v1984 = vsub.s32 0, %v1983
        %v1985 = vrot.slane %v1980, %v1984
        %v1987 = vmul.f32 %v1979, %v1985
        %v1988 = vld [vmem:[%s896] sm:$0x1]
        %v1990 = vlaneseq
        %v1991 = vshrl.u32 %v1990, 7
        %v1992 = vsub.s32 0, %v1991
        %v1993 = vrot.slane %v1988, %v1992
        %v1995 = vadd.f32 %v1987, %v1993
        %1996 = vst.msk [vmem:[%s836] sm:$0xff] %vm933, %v1995
        %s1997 = sand.u32 %s526, 1
        %s1998 = scalar_lea.sflag [#allocation4], %s1997
        %s1999 = sand.u32 %s526, 1
        %s2000 = smul.addr %s1999, 8
        %s2001 = scalar_lea.vmem [#allocation7], %s2000
        // Predicated region
        $region105: #{tpu_custom_call.1} parent=91 // pred_check
          %p2002 = pneg %p536
        $region106: #{tpu_custom_call.1} parent=91 // pred_check_branch
          %2004 = sbr.rel (%p2002) target = $region108
        $region107: #{tpu_custom_call.1} parent=91 // pred_region
          %s2006 = ssub.s32 128, 128
          %2007 = vsyncadd %s1998, %s2006
          %s2008 = smul.addr %s42, 128
          %s2009 = scalar_lea.hbm %s18, %s2008
          %s2011 = sshll.u32 %s2001, 4
          %s2012 = int_to_ptr.vmem [resolvable:$true] %s2011
          %2014 = dma.vmem_to_hbm [thread:$0]  %s2012, 128, %s2009, %s1998
        $region108: #{tpu_custom_call.1} parent=91 // pred_fallthru
          _
      $region92: #{tpu_custom_call.1} parent=5 // pred_fallthru
        _
      %p2015 = scmp.le.s32.totalorder 2, %s33
      // Predicated region
      $region109: #{tpu_custom_call.1} parent=5 // pred_check
        %p2016 = pneg %p2015
      $region110: #{tpu_custom_call.1} parent=5 // pred_check_branch
        %2018 = sbr.rel (%p2016) target = $region112
      $region111: #{tpu_custom_call.1} parent=5 // pred_region
        %s2019 = ssub.s32 %s33, 2
        // Predicated region
        $region113: #{tpu_custom_call.1} parent=111 // pred_check
          %p2020 = pneg %p542
        $region114: #{tpu_custom_call.1} parent=111 // pred_check_branch
          %2022 = sbr.rel (%p2020) target = $region116
        $region115: #{tpu_custom_call.1} parent=111 // pred_region
          %s2023 = sand.u32 %s527, 1
          %s2024 = scalar_lea.sflag [#allocation4], %s2023
          %s2025 = sand.u32 %s527, 1
          %s2026 = smul.addr %s2025, 8
          %s2027 = scalar_lea.vmem [#allocation7], %s2026
          %2028 = dma.done %s2024, 128
        $region116: #{tpu_custom_call.1} parent=111 // pred_fallthru
          _
      $region112: #{tpu_custom_call.1} parent=5 // pred_fallthru
        _
    $region6: #{tpu_custom_call.1} parent=1 // loop_footer
      %s37 = sadd.s32 1, %s33
    $region7: #{tpu_custom_call.1} parent=1 // loop_footer_branch
      %32 = sbr.rel target = $region3
    $region8: #{tpu_custom_call.1} parent=1 // loop_exit
      _
    %2029 = vsyncpa [#allocation3], 1
    %s2030 = scalar_lea.sflag [#allocation3], 1
    %2031 = vsyncpa %s2030, 1
    %2032 = vsyncpa [#allocation6], 1
    %s2033 = scalar_lea.sflag [#allocation6], 1
    %2034 = vsyncpa %s2033, 1
    %2035 = vsyncpa [#allocation4], 1
    %s2036 = scalar_lea.sflag [#allocation4], 1
    %2037 = vsyncpa %s2036, 1

</llo_original>
